<compile_context>
chip_gen: v6e
topology: v6e:2x2x1
jax: 0.10.0
libtpu: 0.0.40
codegen_flags: <defaults>
</compile_context>

<pallas_src>
import functools

import jax
import jax.numpy as jnp
from jax import lax
from jax.experimental import pallas as pl
from jax.experimental.pallas import tpu as pltpu


# ----------------------------------------------------------------------------
# Pallas kernel: whole forward fused (chained matmuls + ReLU + masked softmax)
# ----------------------------------------------------------------------------
def _fused_forward_kernel(x_ref, w_ref, b_ref, o_ref, *, layer_dims, out_splits):
    """One batch tile of the whole forward.

    x_ref : (TB, K0_pad)  bf16  -- pipelined per grid step
    w_ref : (K_total, N_slab) bf16 -- all layer weights packed, VMEM-resident
    b_ref : (n_layers, N_slab) f32 -- all layer biases packed, VMEM-resident
    o_ref : (TB, N_out)   f32   -- lane-dense log-prob slab (heads packed)

    layer_dims : tuple of (row_offset, K_pad, N_pad) per layer (static).
    out_splits : per-head logit widths (static).
    """
    n_layers = len(layer_dims)
    h = x_ref[...]                                           # (TB, K0_pad) bf16
    logits = None
    for i, (r0, kp, npad) in enumerate(layer_dims):
        # Static, tile-aligned views into the packed slabs (zero-cost).
        w = w_ref[r0:r0 + kp, 0:npad]                        # (K_pad, N_pad) bf16
        b = b_ref[i:i + 1, 0:npad]                           # (1, N_pad) f32
        y = jnp.dot(h, w, preferred_element_type=jnp.float32) + b
        if i + 1 < n_layers:
            h = jnp.maximum(y, 0.0).astype(jnp.bfloat16)     # conv/MLP ReLU
        else:
            logits = y                                       # (TB, N_out) f32

    # Per-head log-softmax via lane masks on the full-width slab: no slicing,
    # no concatenation, one unmasked lane-dense store.
    lane = lax.broadcasted_iota(jnp.int32, logits.shape, 1)
    out = jnp.zeros_like(logits)
    start = 0
    for d in out_splits:
        mask = (lane >= start) & (lane < start + d)
        m = jnp.max(jnp.where(mask, logits, -jnp.inf), axis=-1, keepdims=True)
        e = jnp.where(mask, jnp.exp(logits - m), 0.0)        # EUP exp, VPU select
        lse = jnp.log(jnp.sum(e, axis=-1, keepdims=True))
        out = jnp.where(mask, logits - m - lse, out)
        start += d
    o_ref[...] = out.astype(o_ref.dtype)


# ----------------------------------------------------------------------------
# One-time weight preprocessing (Toeplitz conv, head fusion, padding, packing)
# ----------------------------------------------------------------------------
def _conv1d_as_matmul(w, b, L_in, stride, in_order, out_order):
    """Express Conv1d (valid padding) as a dense (L_in*C_in, L_out*C_out) matmul.

    Row index order:  "cl" -> ci*L_in + l   (PyTorch flatten of (C_in, L_in)),
                      "lc" -> l*C_in + ci.
    Col index order:  "cl" -> co*L_out + t  (PyTorch .view of (C_out, L_out)),
                      "lc" -> t*C_out + co.
    """
    C_out, C_in, K = w.shape
    L_out = (L_in - K) // stride + 1
    l = jnp.arange(L_in)[:, None]
    t = jnp.arange(L_out)[None, :]
    off = l - stride * t                                      # (L_in, L_out)
    valid = (off >= 0) & (off < K)
    wg = w[:, :, jnp.clip(off, 0, K - 1)]                     # (C_out, C_in, L_in, L_out)
    wg = jnp.where(valid[None, None], wg, 0.0)
    row_axes = (1, 2) if in_order == "cl" else (2, 1)         # wg axes = (co, ci, l, t)
    col_axes = (0, 3) if out_order == "cl" else (3, 0)
    Wt = jnp.transpose(wg, row_axes + col_axes).reshape(L_in * C_in, L_out * C_out)
    bt = jnp.repeat(b, L_out) if out_order == "cl" else jnp.tile(b, L_out)
    return Wt, bt, L_out, C_out


def _block_diag(mats):
    rows = sum(m.shape[0] for m in mats)
    cols = sum(m.shape[1] for m in mats)
    out = jnp.zeros((rows, cols), mats[0].dtype)
    r = c = 0
    for m in mats:
        out = out.at[r:r + m.shape[0], c:c + m.shape[1]].set(m)
        r += m.shape[0]
        c += m.shape[1]
    return out


def _pad_to(a, rows, cols):
    return jnp.zeros((rows, cols), a.dtype).at[:a.shape[0], :a.shape[1]].set(a)


def prepare_signal2symbol(params, hidden_params, input_params, lane=128):
    """Run ONCE at weight-load time. Returns (wslab_bf16, bslab_f32, meta).

    Builds Toeplitz conv matrices, fuses both heads (layer-0 concat along N,
    deeper layers / output as block-diag), zero-pads every K/N to 128-lane
    multiples, and packs everything into one weight slab + one bias slab.
    """
    C_in = input_params["channels"]
    L = input_params["dim"]
    strides = hidden_params["stride"]
    n_conv = len(params["conv"])
    heads = params["heads"]
    nlayers = len(heads[0]["mlp"])

    # Conv layers -> Toeplitz matmul weights.  Last conv emits PyTorch
    # .view(B, C*L) column order so the MLP weights match exactly.
    mats = []
    L_cur = L
    for li, ((w, b), s) in enumerate(zip(params["conv"], strides)):
        Wt, bt, L_cur, _ = _conv1d_as_matmul(
            w, b, L_cur, s,
            in_order="cl" if li == 0 else "lc",
            out_order="cl" if li == n_conv - 1 else "lc")
        mats.append((Wt, bt))

    # Head fusion: layer-0 concatenated along N; deeper MLP layers and the
    # output layer block-diagonal (heads stay independent).
    w0 = jnp.concatenate([h["mlp"][0][0] for h in heads], axis=1)
    b0 = jnp.concatenate([h["mlp"][0][1] for h in heads], axis=0)
    mats.append((w0, b0))
    for li in range(1, nlayers):
        wl = _block_diag([h["mlp"][li][0] for h in heads])
        bl = jnp.concatenate([h["mlp"][li][1] for h in heads], axis=0)
        mats.append((wl, bl))
    wo = _block_diag([h["out"][0] for h in heads])
    bo = jnp.concatenate([h["out"][1] for h in heads], axis=0)
    mats.append((wo, bo))
    out_splits = tuple(int(h["out"][0].shape[1]) for h in heads)

    def rup(n):
        return ((n + lane - 1) // lane) * lane

    k0 = int(mats[0][0].shape[0])
    k0_pad = rup(k0)
    n_slab = max(rup(int(W.shape[1])) for W, _ in mats)

    w_blocks, b_rows, layer_dims = [], [], []
    r = 0
    for W, bvec in mats:
        kp, npad = rup(int(W.shape[0])), rup(int(W.shape[1]))
        w_blocks.append(_pad_to(W.astype(jnp.float32), kp, n_slab))
        b_rows.append(_pad_to(bvec.reshape(1, -1).astype(jnp.float32), 1, n_slab))
        layer_dims.append((r, kp, npad))
        r += kp

    wslab = jnp.concatenate(w_blocks, axis=0).astype(jnp.bfloat16)  # (K_total, N_slab)
    bslab = jnp.concatenate(b_rows, axis=0)                         # (n_layers, N_slab) f32

    assert sum(out_splits) <= layer_dims[-1][2]
    meta = {
        "layer_dims": tuple(layer_dims),
        "out_splits": out_splits,
        "k0": k0,
        "k0_pad": k0_pad,
        "n_out": layer_dims[-1][2],
    }
    return wslab, bslab, meta


# ----------------------------------------------------------------------------
# Forward pass (mirrors Signal2SymbolConvNet.forward) - single pallas_call
# ----------------------------------------------------------------------------
def signal2symbol_forward(x, wslab, bslab, meta, tb=128):
    """x: (B, C_in, L) float32 (PyTorch NCW). Returns list of per-head log-probs."""
    B, C_in, L = x.shape
    k0, k0_pad = meta["k0"], meta["k0_pad"]
    n_out = meta["n_out"]
    assert C_in * L == k0

    # Lane-dense, batch-tiled input (PyTorch (ci, l) flatten order).
    x_flat = x.reshape(B, C_in * L).astype(jnp.bfloat16)
    b_pad = -(-B // tb) * tb
    x_pad = jnp.zeros((b_pad, k0_pad), jnp.bfloat16).at[:B, :k0].set(x_flat)

    kernel = functools.partial(
        _fused_forward_kernel,
        layer_dims=meta["layer_dims"],
        out_splits=meta["out_splits"])

    out_pad = pl.pallas_call(
        kernel,
        out_shape=jax.ShapeDtypeStruct((b_pad, n_out), jnp.float32),
        grid=(b_pad // tb,),                                  # batch tiles
        in_specs=[
            pl.BlockSpec((tb, k0_pad), lambda i: (i, 0)),     # input: pipelined
            pl.BlockSpec(wslab.shape, lambda i: (0, 0)),      # weights: VMEM-resident
            pl.BlockSpec(bslab.shape, lambda i: (0, 0)),      # biases: VMEM-resident
        ],
        out_specs=pl.BlockSpec((tb, n_out), lambda i: (i, 0)),
        compiler_params=pltpu.CompilerParams(
            dimension_semantics=("parallel",),                # v7x: both TCs
            vmem_limit_bytes=32 * 1024 * 1024),               # within v7x scoped budget
        # TODO(synk): if the Toeplitz slab grows toward tens of MiB (big L /
        # channels), add K-tiling (grid over K + VMEM f32 accumulator with
        # pl.when init/finalize) before it hits v7x's 64 MiB VMEM.
    )(x_pad, wslab, bslab)

    outs = []
    start = 0
    for d in meta["out_splits"]:
        outs.append(out_pad[:B, start:start + d])
        start += d
    return outs


# ----------------------------------------------------------------------------
# Plain-JAX reference (mirrors the PyTorch module; same bf16/f32 precision)
# ----------------------------------------------------------------------------
def reference_forward(x, params, hidden_params):
    h = x.astype(jnp.bfloat16)
    for (w, b), s in zip(params["conv"], hidden_params["stride"]):
        y = lax.conv_general_dilated(
            h, w.astype(jnp.bfloat16), window_strides=(s,), padding="VALID",
            dimension_numbers=("NCH", "OIH", "NCH"),
            preferred_element_type=jnp.float32)
        h = jnp.maximum(y + b[None, :, None], 0.0).astype(jnp.bfloat16)
    z0 = h.reshape(h.shape[0], -1)                            # PyTorch .view(B, C*L)
    outs = []
    for head in params["heads"]:
        z = z0
        for w, b in head["mlp"]:
            z = jnp.maximum(
                jnp.dot(z, w.astype(jnp.bfloat16),
                        preferred_element_type=jnp.float32) + b, 0.0
            ).astype(jnp.bfloat16)
        w, b = head["out"]
        logits = jnp.dot(z, w.astype(jnp.bfloat16),
                         preferred_element_type=jnp.float32) + b
        outs.append(jax.nn.log_softmax(logits, axis=-1))
    return outs


# ----------------------------------------------------------------------------
# Parameter construction (deterministic, in-script)
# ----------------------------------------------------------------------------
def conv_out_lengths(L, kernel_sizes, strides):
    lengths = []
    for k, s in zip(kernel_sizes, strides):
        L = (L - k) // s + 1
        lengths.append(L)
    return lengths


def init_params(key, input_params, hidden_params, output_params):
    channels = hidden_params["channels"]
    ksizes = hidden_params["kernel_size"]
    strides = hidden_params["stride"]
    hidden_dim = hidden_params["dim"]
    nlayers = hidden_params["nlayers"]

    lengths = conv_out_lengths(input_params["dim"], ksizes, strides)
    conv_out_shape = channels[-1] * lengths[-1]

    params = {"conv": [], "heads": []}
    in_ch = input_params["channels"]
    for c_out, k in zip(channels, ksizes):
        key, kw, kb = jax.random.split(key, 3)
        scale = 1.0 / jnp.sqrt(in_ch * k)
        w = jax.random.normal(kw, (c_out, in_ch, k), jnp.float32) * scale
        b = jax.random.normal(kb, (c_out,), jnp.float32) * scale
        params["conv"].append((w, b))
        in_ch = c_out

    for out in output_params:
        head = {"mlp": []}
        d_in = conv_out_shape
        for _ in range(nlayers):
            key, kw, kb = jax.random.split(key, 3)
            scale = 1.0 / jnp.sqrt(d_in)
            w = jax.random.normal(kw, (d_in, hidden_dim), jnp.float32) * scale
            b = jax.random.normal(kb, (hidden_dim,), jnp.float32) * scale
            head["mlp"].append((w, b))
            d_in = hidden_dim
        key, kw, kb = jax.random.split(key, 3)
        scale = 1.0 / jnp.sqrt(hidden_dim)
        head["out"] = (
            jax.random.normal(kw, (hidden_dim, out["dim"]), jnp.float32) * scale,
            jax.random.normal(kb, (out["dim"],), jnp.float32) * scale,
        )
        params["heads"].append(head)
    return params


# ----------------------------------------------------------------------------
if __name__ == "__main__":
    input_params = {"channels": 1, "dim": 64}
    hidden_params = {
        "channels": [8, 16],
        "kernel_size": [8, 8],
        "stride": [2, 2],
        "dim": 32,
        "nlayers": 2,
    }
    output_params = [{"dim": 5}, {"dim": 7}]

    key = jax.random.PRNGKey(0)
    key, kx, kp = jax.random.split(key, 3)

    B = 2
    x = jax.random.normal(
        kx, (B, input_params["channels"], input_params["dim"]), jnp.float32)
    params = init_params(kp, input_params, hidden_params, output_params)

    # One-time weight preprocessing (hoisted off the per-forward critical path).
    wslab, bslab, meta = prepare_signal2symbol(params, hidden_params, input_params)
    wslab = jax.device_put(wslab)
    bslab = jax.device_put(bslab)

    fwd = jax.jit(lambda xx, ww, bb: signal2symbol_forward(xx, ww, bb, meta))
    outs = fwd(x, wslab, bslab)
    outs = [jax.block_until_ready(o) for o in outs]

    # sanity: shapes, per-row normalization, agreement with plain-JAX reference
    assert outs[0].shape == (B, 5) and outs[1].shape == (B, 7)
    for o in outs:
        s = jnp.sum(jnp.exp(o), axis=-1)
        assert jnp.allclose(s, jnp.ones_like(s), atol=1e-4), s
    refs = reference_forward(x, params, hidden_params)
    for o, r in zip(outs, refs):
        assert jnp.allclose(o, r, atol=3e-2, rtol=3e-2), (o, r)

    print("KERNEL_OK")
</pallas_src>

<mosaic_0001>
module attributes {stable_mosaic.version = 11 : i64} {
  func.func @_fused_forward_kernel(%arg0: i32, %arg1: memref<128x128xbf16, #tpu.memory_space<vmem>>, %arg2: memref<896x256xbf16, #tpu.memory_space<vmem>>, %arg3: memref<5x256xf32, #tpu.memory_space<vmem>>, %arg4: memref<128x128xf32, #tpu.memory_space<vmem>>) attributes {dimension_semantics = [#tpu.dimension_semantics<parallel>], iteration_bounds = array<i64: 1>, scalar_prefetch = 0 : i64, scratch_operands = 0 : i64, tpu.core_type = #tpu.core_type<tc>, window_params = [{transform_indices = @transform_0, window_bounds = array<i64: 128, 128>}, {pipeline_mode = #tpu.pipeline_mode<synchronous>, transform_indices = @transform_1, window_bounds = array<i64: 896, 256>}, {pipeline_mode = #tpu.pipeline_mode<synchronous>, transform_indices = @transform_2, window_bounds = array<i64: 5, 256>}, {transform_indices = @transform_3, window_bounds = array<i64: 128, 128>}]} {
    %c0 = arith.constant 0 : index
    %c0_0 = arith.constant 0 : index
    %0 = vector.load %arg1[%c0, %c0_0] : memref<128x128xbf16, #tpu.memory_space<vmem>>, vector<128x128xbf16>
    %c0_1 = arith.constant 0 : index
    %c0_2 = arith.constant 0 : index
    %1 = vector.load %arg2[%c0_1, %c0_2] : memref<896x256xbf16, #tpu.memory_space<vmem>>, vector<128x256xbf16>
    %c0_3 = arith.constant 0 : index
    %c0_4 = arith.constant 0 : index
    %2 = vector.load %arg3[%c0_3, %c0_4] : memref<5x256xf32, #tpu.memory_space<vmem>>, vector<1x256xf32>
    %cst = arith.constant dense<0.000000e+00> : vector<128x256xf32>
    %3 = tpu.matmul %0, %1, %cst {dimension_numbers = #tpu.dot_dimension_numbers<[1], [0], [0], [1], [0, 0, 1, 1], [], []>} : vector<128x128xbf16>, vector<128x256xbf16>, vector<128x256xf32> -> vector<128x256xf32>
    %4 = vector.broadcast %2 : vector<1x256xf32> to vector<128x256xf32>
    %5 = arith.addf %3, %4 : vector<128x256xf32>
    %cst_5 = arith.constant 0.000000e+00 : f32
    %6 = vector.broadcast %cst_5 : f32 to vector<128x256xf32>
    %7 = arith.maximumf %5, %6 : vector<128x256xf32>
    %8 = arith.truncf %7 : vector<128x256xf32> to vector<128x256xbf16>
    %c128 = arith.constant 128 : index
    %c0_6 = arith.constant 0 : index
    %9 = vector.load %arg2[%c128, %c0_6] : memref<896x256xbf16, #tpu.memory_space<vmem>>, vector<256x256xbf16>
    %c1 = arith.constant 1 : index
    %c0_7 = arith.constant 0 : index
    %10 = vector.load %arg3[%c1, %c0_7] : memref<5x256xf32, #tpu.memory_space<vmem>>, vector<1x256xf32>
    %cst_8 = arith.constant dense<0.000000e+00> : vector<128x256xf32>
    %11 = tpu.matmul %8, %9, %cst_8 {dimension_numbers = #tpu.dot_dimension_numbers<[1], [0], [0], [1], [0, 0, 1, 1], [], []>} : vector<128x256xbf16>, vector<256x256xbf16>, vector<128x256xf32> -> vector<128x256xf32>
    %12 = vector.broadcast %10 : vector<1x256xf32> to vector<128x256xf32>
    %13 = arith.addf %11, %12 : vector<128x256xf32>
    %cst_9 = arith.constant 0.000000e+00 : f32
    %14 = vector.broadcast %cst_9 : f32 to vector<128x256xf32>
    %15 = arith.maximumf %13, %14 : vector<128x256xf32>
    %16 = arith.truncf %15 : vector<128x256xf32> to vector<128x256xbf16>
    %c384 = arith.constant 384 : index
    %c0_10 = arith.constant 0 : index
    %17 = vector.load %arg2[%c384, %c0_10] : memref<896x256xbf16, #tpu.memory_space<vmem>>, vector<256x128xbf16>
    %c2 = arith.constant 2 : index
    %c0_11 = arith.constant 0 : index
    %18 = vector.load %arg3[%c2, %c0_11] : memref<5x256xf32, #tpu.memory_space<vmem>>, vector<1x128xf32>
    %cst_12 = arith.constant dense<0.000000e+00> : vector<128x128xf32>
    %19 = tpu.matmul %16, %17, %cst_12 {dimension_numbers = #tpu.dot_dimension_numbers<[1], [0], [0], [1], [0, 0, 1, 1], [], []>} : vector<128x256xbf16>, vector<256x128xbf16>, vector<128x128xf32> -> vector<128x128xf32>
    %20 = vector.broadcast %18 : vector<1x128xf32> to vector<128x128xf32>
    %21 = arith.addf %19, %20 : vector<128x128xf32>
    %cst_13 = arith.constant 0.000000e+00 : f32
    %22 = vector.broadcast %cst_13 : f32 to vector<128x128xf32>
    %23 = arith.maximumf %21, %22 : vector<128x128xf32>
    %24 = arith.truncf %23 : vector<128x128xf32> to vector<128x128xbf16>
    %c640 = arith.constant 640 : index
    %c0_14 = arith.constant 0 : index
    %25 = vector.load %arg2[%c640, %c0_14] : memref<896x256xbf16, #tpu.memory_space<vmem>>, vector<128x128xbf16>
    %c3 = arith.constant 3 : index
    %c0_15 = arith.constant 0 : index
    %26 = vector.load %arg3[%c3, %c0_15] : memref<5x256xf32, #tpu.memory_space<vmem>>, vector<1x128xf32>
    %cst_16 = arith.constant dense<0.000000e+00> : vector<128x128xf32>
    %27 = tpu.matmul %24, %25, %cst_16 {dimension_numbers = #tpu.dot_dimension_numbers<[1], [0], [0], [1], [0, 0, 1, 1], [], []>} : vector<128x128xbf16>, vector<128x128xbf16>, vector<128x128xf32> -> vector<128x128xf32>
    %28 = vector.broadcast %26 : vector<1x128xf32> to vector<128x128xf32>
    %29 = arith.addf %27, %28 : vector<128x128xf32>
    %cst_17 = arith.constant 0.000000e+00 : f32
    %30 = vector.broadcast %cst_17 : f32 to vector<128x128xf32>
    %31 = arith.maximumf %29, %30 : vector<128x128xf32>
    %32 = arith.truncf %31 : vector<128x128xf32> to vector<128x128xbf16>
    %c768 = arith.constant 768 : index
    %c0_18 = arith.constant 0 : index
    %33 = vector.load %arg2[%c768, %c0_18] : memref<896x256xbf16, #tpu.memory_space<vmem>>, vector<128x128xbf16>
    %c4 = arith.constant 4 : index
    %c0_19 = arith.constant 0 : index
    %34 = vector.load %arg3[%c4, %c0_19] : memref<5x256xf32, #tpu.memory_space<vmem>>, vector<1x128xf32>
    %cst_20 = arith.constant dense<0.000000e+00> : vector<128x128xf32>
    %35 = tpu.matmul %32, %33, %cst_20 {dimension_numbers = #tpu.dot_dimension_numbers<[1], [0], [0], [1], [0, 0, 1, 1], [], []>} : vector<128x128xbf16>, vector<128x128xbf16>, vector<128x128xf32> -> vector<128x128xf32>
    %36 = vector.broadcast %34 : vector<1x128xf32> to vector<128x128xf32>
    %37 = arith.addf %35, %36 : vector<128x128xf32>
    %38 = tpu.iota {dimensions = array<i32: 1>} : vector<128x128xi32>
    %cst_21 = arith.constant 0.000000e+00 : f32
    %39 = vector.broadcast %cst_21 : f32 to vector<128x128xf32>
    %c0_i32 = arith.constant 0 : i32
    %40 = vector.broadcast %c0_i32 : i32 to vector<128x128xi32>
    %41 = arith.cmpi sge, %38, %40 : vector<128x128xi32>
    %c5_i32 = arith.constant 5 : i32
    %42 = vector.broadcast %c5_i32 : i32 to vector<128x128xi32>
    %43 = arith.cmpi slt, %38, %42 : vector<128x128xi32>
    %44 = arith.andi %41, %43 : vector<128x128xi1>
    %cst_22 = arith.constant 0xFF800000 : f32
    %45 = vector.broadcast %cst_22 : f32 to vector<128x128xf32>
    %46 = arith.select %44, %37, %45 : vector<128x128xi1>, vector<128x128xf32>
    %cst_23 = arith.constant dense<0xFF800000> : vector<128xf32>
    %47 = vector.multi_reduction <maximumf>, %46, %cst_23 [1] : vector<128x128xf32> to vector<128xf32>
    %48 = vector.shape_cast %47 : vector<128xf32> to vector<128x1xf32>
    %49 = vector.broadcast %48 : vector<128x1xf32> to vector<128x128xf32>
    %50 = arith.subf %37, %49 : vector<128x128xf32>
    %51 = math.exp %50 : vector<128x128xf32>
    %cst_24 = arith.constant 0.000000e+00 : f32
    %52 = vector.broadcast %cst_24 : f32 to vector<128x128xf32>
    %53 = arith.select %44, %51, %52 : vector<128x128xi1>, vector<128x128xf32>
    %cst_25 = arith.constant dense<0.000000e+00> : vector<128xf32>
    %54 = vector.multi_reduction <add>, %53, %cst_25 [1] : vector<128x128xf32> to vector<128xf32>
    %55 = vector.shape_cast %54 : vector<128xf32> to vector<128x1xf32>
    %56 = math.log %55 : vector<128x1xf32>
    %57 = vector.broadcast %48 : vector<128x1xf32> to vector<128x128xf32>
    %58 = arith.subf %37, %57 : vector<128x128xf32>
    %59 = vector.broadcast %56 : vector<128x1xf32> to vector<128x128xf32>
    %60 = arith.subf %58, %59 : vector<128x128xf32>
    %61 = arith.select %44, %60, %39 : vector<128x128xi1>, vector<128x128xf32>
    %c5_i32_26 = arith.constant 5 : i32
    %62 = vector.broadcast %c5_i32_26 : i32 to vector<128x128xi32>
    %63 = arith.cmpi sge, %38, %62 : vector<128x128xi32>
    %c12_i32 = arith.constant 12 : i32
    %64 = vector.broadcast %c12_i32 : i32 to vector<128x128xi32>
    %65 = arith.cmpi slt, %38, %64 : vector<128x128xi32>
    %66 = arith.andi %63, %65 : vector<128x128xi1>
    %cst_27 = arith.constant 0xFF800000 : f32
    %67 = vector.broadcast %cst_27 : f32 to vector<128x128xf32>
    %68 = arith.select %66, %37, %67 : vector<128x128xi1>, vector<128x128xf32>
    %cst_28 = arith.constant dense<0xFF800000> : vector<128xf32>
    %69 = vector.multi_reduction <maximumf>, %68, %cst_28 [1] : vector<128x128xf32> to vector<128xf32>
    %70 = vector.shape_cast %69 : vector<128xf32> to vector<128x1xf32>
    %71 = vector.broadcast %70 : vector<128x1xf32> to vector<128x128xf32>
    %72 = arith.subf %37, %71 : vector<128x128xf32>
    %73 = math.exp %72 : vector<128x128xf32>
    %cst_29 = arith.constant 0.000000e+00 : f32
    %74 = vector.broadcast %cst_29 : f32 to vector<128x128xf32>
    %75 = arith.select %66, %73, %74 : vector<128x128xi1>, vector<128x128xf32>
    %cst_30 = arith.constant dense<0.000000e+00> : vector<128xf32>
    %76 = vector.multi_reduction <add>, %75, %cst_30 [1] : vector<128x128xf32> to vector<128xf32>
    %77 = vector.shape_cast %76 : vector<128xf32> to vector<128x1xf32>
    %78 = math.log %77 : vector<128x1xf32>
    %79 = vector.broadcast %70 : vector<128x1xf32> to vector<128x128xf32>
    %80 = arith.subf %37, %79 : vector<128x128xf32>
    %81 = vector.broadcast %78 : vector<128x1xf32> to vector<128x128xf32>
    %82 = arith.subf %80, %81 : vector<128x128xf32>
    %83 = arith.select %66, %82, %61 : vector<128x128xi1>, vector<128x128xf32>
    %c0_31 = arith.constant 0 : index
    %c0_32 = arith.constant 0 : index
    %84 = vector.load %arg4[%c0_31, %c0_32] : memref<128x128xf32, #tpu.memory_space<vmem>>, vector<128x128xf32>
    tpu.vector_store %arg4[%c0_31, %c0_32], %83 {strides = array<i32>} : memref<128x128xf32, #tpu.memory_space<vmem>>, vector<128x128xf32>,
    return
  }
  func.func @transform_0(%arg0: i32) -> (i32, i32) {
    %c0_i32 = arith.constant 0 : i32
    %c0_i32_0 = arith.constant 0 : i32
    return %arg0, %c0_i32 : i32, i32
  }
  func.func @transform_1(%arg0: i32) -> (i32, i32) {
    %c0_i32 = arith.constant 0 : i32
    %c0_i32_0 = arith.constant 0 : i32
    %c0_i32_1 = arith.constant 0 : i32
    return %c0_i32, %c0_i32_0 : i32, i32
  }
  func.func @transform_2(%arg0: i32) -> (i32, i32) {
    %c0_i32 = arith.constant 0 : i32
    %c0_i32_0 = arith.constant 0 : i32
    %c0_i32_1 = arith.constant 0 : i32
    return %c0_i32, %c0_i32_0 : i32, i32
  }
  func.func @transform_3(%arg0: i32) -> (i32, i32) {
    %c0_i32 = arith.constant 0 : i32
    %c0_i32_0 = arith.constant 0 : i32
    return %arg0, %c0_i32 : i32, i32
  }
}

</mosaic_0001>

<llo_original>
// kernel: _lambda_.1
$region0: #{_lambda_.1}
  #allocation0 [shape = 'u32[]', space=smem, size = 0x4, offset = 0x4, fixed_abs, tag = 'smem constant byte address 0x4 - core index']
  #allocation1 [shape = 'u32[144,128]{1,0:T(1,128)}', space=vmem, size = 0x12000, scoped, tag = 'internal scratch']
  %s0 = inlined_call_operand.vmem [shape: bf16[128,128], index: 0, kind: input, shape index: {}]
  %s1 = inlined_call_operand.hbm [shape: bf16[896,256], index: 1, kind: input, shape index: {}]
  %s2 = inlined_call_operand.vmem [shape: f32[5,256], index: 2, kind: input, shape index: {}]
  %s3 = inlined_call_operand.vmem [shape: f32[128,128], index: 3, kind: output, shape index: {}]
  %s4 = sld [smem:[#allocation0]]
  $region26: #{_lambda_.1} parent=0
    _
  %s6 = ssub.s32 1, %s4
  %s7 = scalar_select 0, %s6, %s4
  $region1: #{_lambda_.1} parent=0
    #allocation2 [shape = 'u8[458752]{0}', space=vmem, size = 0x70000, scoped, tag = 'input window, operand 1, single buffered']
    #allocation3 [shape = 's32[1]{0}', space=sflag, size = 0x4, scoped, tag = 'scoped memory for _lambda_.1']
    %8 = vsyncpa [#allocation3], 0
    // Predicated region
    $region2: #{_lambda_.1} parent=1 // pred_check
      _
    $region3: #{_lambda_.1} parent=1 // pred_check_branch
      %10 = sbr.rel (0) target = $region5
    $region4: #{_lambda_.1} parent=1 // pred_region
      _
    $region5: #{_lambda_.1} parent=1 // pred_fallthru
      _
    // Predicated region
    $region6: #{_lambda_.1} parent=1 // pred_check
      _
    $region7: #{_lambda_.1} parent=1 // pred_check_branch
      %12 = sbr.rel (0) target = $region9
    $region8: #{_lambda_.1} parent=1 // pred_region
      %s14 = ssub.s32 14336, 14336
      %15 = vsyncadd [#allocation3], %s14
      %s16 = sshll.u32 [#allocation2], 4
      %s17 = int_to_ptr.vmem [resolvable:$true] %s16
      %22 = dma.hbm_to_vmem [thread:$0]  %s1, 14336, %s17, [#allocation3], 128, 128, 8
    $region9: #{_lambda_.1} parent=1 // pred_fallthru
      _
    // Predicated region
    $region10: #{_lambda_.1} parent=1 // pred_check
      _
    $region11: #{_lambda_.1} parent=1 // pred_check_branch
      %24 = sbr.rel (0) target = $region13
    $region12: #{_lambda_.1} parent=1 // pred_region
      _
    $region13: #{_lambda_.1} parent=1 // pred_fallthru
      _
    // Predicated region
    $region14: #{_lambda_.1} parent=1 // pred_check
      _
    $region15: #{_lambda_.1} parent=1 // pred_check_branch
      %26 = sbr.rel (0) target = $region17
    $region16: #{_lambda_.1} parent=1 // pred_region
      %27 = dma.done [#allocation3], 14336
    $region17: #{_lambda_.1} parent=1 // pred_fallthru
      _
    %v29 = vld [vmem:[%s0] sm:$0xf]
    %v30 = vld [vmem:[%s0 + $0x4] sm:$0xf]
    %v31 = vld [vmem:[%s0 + $0x8] sm:$0xf]
    %v32 = vld [vmem:[%s0 + $0xc] sm:$0xf]
    %v33 = vld [vmem:[%s0 + $0x10] sm:$0xf]
    %v34 = vld [vmem:[%s0 + $0x14] sm:$0xf]
    %v35 = vld [vmem:[%s0 + $0x18] sm:$0xf]
    %v36 = vld [vmem:[%s0 + $0x1c] sm:$0xf]
    %v37 = vld [vmem:[%s0 + $0x20] sm:$0xf]
    %v38 = vld [vmem:[%s0 + $0x24] sm:$0xf]
    %v39 = vld [vmem:[%s0 + $0x28] sm:$0xf]
    %v40 = vld [vmem:[%s0 + $0x2c] sm:$0xf]
    %v41 = vld [vmem:[%s0 + $0x30] sm:$0xf]
    %v42 = vld [vmem:[%s0 + $0x34] sm:$0xf]
    %v43 = vld [vmem:[%s0 + $0x38] sm:$0xf]
    %v44 = vld [vmem:[%s0 + $0x3c] sm:$0xf]
    %v45 = vld [vmem:[#allocation2] sm:$0xff]
    %v46 = vld [vmem:[#allocation2 + $0x8] sm:$0xff]
    %v47 = vld [vmem:[#allocation2 + $0x10] sm:$0xff]
    %v48 = vld [vmem:[#allocation2 + $0x18] sm:$0xff]
    %v49 = vld [vmem:[#allocation2 + $0x20] sm:$0xff]
    %v50 = vld [vmem:[#allocation2 + $0x28] sm:$0xff]
    %v51 = vld [vmem:[#allocation2 + $0x30] sm:$0xff]
    %v52 = vld [vmem:[#allocation2 + $0x38] sm:$0xff]
    %v53 = vld [vmem:[#allocation2 + $0x40] sm:$0xff]
    %v54 = vld [vmem:[#allocation2 + $0x48] sm:$0xff]
    %v55 = vld [vmem:[#allocation2 + $0x50] sm:$0xff]
    %v56 = vld [vmem:[#allocation2 + $0x58] sm:$0xff]
    %v57 = vld [vmem:[#allocation2 + $0x60] sm:$0xff]
    %v58 = vld [vmem:[#allocation2 + $0x68] sm:$0xff]
    %v59 = vld [vmem:[#allocation2 + $0x70] sm:$0xff]
    %v60 = vld [vmem:[#allocation2 + $0x78] sm:$0xff]
    %v61 = vld [vmem:[%s2] ss:$8 sm:$0x3]
    %v63 = vlaneseq
    %v64 = vshrl.u32 %v63, 7
    %v65 = vsub.s32 0, %v64
    %v66 = vrot.slane %v61, %v65
    %v67 = vlaneseq
    %v68 = vshrl.u32 %v67, 7
    %v69 = vsub.s32 1, %v68
    %v70 = vrot.slane %v61, %v69
    %v89 = vunpack.c.l.b16 %v29
    %v90 = vunpack.c.l.b16 %v30
    %v91 = vunpack.c.l.b16 %v31
    %v92 = vunpack.c.l.b16 %v32
    %v93 = vunpack.c.l.b16 %v33
    %v94 = vunpack.c.l.b16 %v34
    %v95 = vunpack.c.l.b16 %v35
    %v96 = vunpack.c.l.b16 %v36
    %v97 = vunpack.c.l.b16 %v37
    %v98 = vunpack.c.l.b16 %v38
    %v99 = vunpack.c.l.b16 %v39
    %v100 = vunpack.c.l.b16 %v40
    %v101 = vunpack.c.l.b16 %v41
    %v102 = vunpack.c.l.b16 %v42
    %v103 = vunpack.c.l.b16 %v43
    %v104 = vunpack.c.l.b16 %v44
    %v105 = vpack.c.b16 %v90, %v89
    %v106 = vpack.c.b16 %v92, %v91
    %v107 = vpack.c.b16 %v94, %v93
    %v108 = vpack.c.b16 %v96, %v95
    %v109 = vpack.c.b16 %v98, %v97
    %v110 = vpack.c.b16 %v100, %v99
    %v111 = vpack.c.b16 %v102, %v101
    %v112 = vpack.c.b16 %v104, %v103
    %v137 = vunpack.c.l.b16 %v45
    %v138 = vunpack.c.h.b16 %v45
    %v139 = vunpack.c.l.b16 %v46
    %v140 = vunpack.c.h.b16 %v46
    %v141 = vunpack.c.l.b16 %v47
    %v142 = vunpack.c.h.b16 %v47
    %v143 = vunpack.c.l.b16 %v48
    %v144 = vunpack.c.h.b16 %v48
    %v145 = vunpack.c.l.b16 %v49
    %v146 = vunpack.c.h.b16 %v49
    %v147 = vunpack.c.l.b16 %v50
    %v148 = vunpack.c.h.b16 %v50
    %v149 = vunpack.c.l.b16 %v51
    %v150 = vunpack.c.h.b16 %v51
    %v151 = vunpack.c.l.b16 %v52
    %v152 = vunpack.c.h.b16 %v52
    %v153 = vunpack.c.l.b16 %v53
    %v154 = vunpack.c.h.b16 %v53
    %v155 = vunpack.c.l.b16 %v54
    %v156 = vunpack.c.h.b16 %v54
    %v157 = vunpack.c.l.b16 %v55
    %v158 = vunpack.c.h.b16 %v55
    %v159 = vunpack.c.l.b16 %v56
    %v160 = vunpack.c.h.b16 %v56
    %v161 = vunpack.c.l.b16 %v57
    %v162 = vunpack.c.h.b16 %v57
    %v163 = vunpack.c.l.b16 %v58
    %v164 = vunpack.c.h.b16 %v58
    %v165 = vunpack.c.l.b16 %v59
    %v166 = vunpack.c.h.b16 %v59
    %v167 = vunpack.c.l.b16 %v60
    %v168 = vunpack.c.h.b16 %v60
    %v169 = vpack.c.b16 %v139, %v137
    %v170 = vpack.c.b16 %v140, %v138
    %v171 = vpack.c.b16 %v143, %v141
    %v172 = vpack.c.b16 %v144, %v142
    %v173 = vpack.c.b16 %v147, %v145
    %v174 = vpack.c.b16 %v148, %v146
    %v175 = vpack.c.b16 %v151, %v149
    %v176 = vpack.c.b16 %v152, %v150
    %v177 = vpack.c.b16 %v155, %v153
    %v178 = vpack.c.b16 %v156, %v154
    %v179 = vpack.c.b16 %v159, %v157
    %v180 = vpack.c.b16 %v160, %v158
    %v181 = vpack.c.b16 %v163, %v161
    %v182 = vpack.c.b16 %v164, %v162
    %v183 = vpack.c.b16 %v167, %v165
    %v184 = vpack.c.b16 %v168, %v166
    %201 = vmatprep.subr.bf16.mxu0 %v184
    %202 = vmatpush1.bf16.msra.mxu0 %v183
    %203 = vmatprep.subr.bf16.mxu0 %v182
    %204 = vmatpush1.bf16.msra.mxu0 %v181
    %205 = vmatprep.subr.bf16.mxu0 %v180
    %206 = vmatpush1.bf16.msra.mxu0 %v179
    %207 = vmatprep.subr.bf16.mxu0 %v178
    %208 = vmatpush1.bf16.msra.mxu0 %v177
    %209 = vmatprep.subr.bf16.mxu0 %v176
    %210 = vmatpush1.bf16.msra.mxu0 %v175
    %211 = vmatprep.subr.bf16.mxu0 %v174
    %212 = vmatpush1.bf16.msra.mxu0 %v173
    %213 = vmatprep.subr.bf16.mxu0 %v172
    %214 = vmatpush1.bf16.msra.mxu0 %v171
    %215 = vmatprep.subr.bf16.mxu0 %v170
    %216 = vmatpush1.bf16.msra.mxu0 %v169
    %217 = vmatprep.subr.bf16.mxu0 0
    %218 = vmatpush2.bf16.msra.mxu0 0
    %219 = vmatprep.subr.bf16.mxu0 0
    %220 = vmatpush2.bf16.msra.mxu0 0
    %221 = vmatprep.subr.bf16.mxu0 0
    %222 = vmatpush2.bf16.msra.mxu0 0
    %223 = vmatprep.subr.bf16.mxu0 0
    %224 = vmatpush2.bf16.msra.mxu0 0
    %225 = vmatprep.subr.bf16.mxu0 0
    %226 = vmatpush2.bf16.msra.mxu0 0
    %227 = vmatprep.subr.bf16.mxu0 0
    %228 = vmatpush2.bf16.msra.mxu0 0
    %229 = vmatprep.subr.bf16.mxu0 0
    %230 = vmatpush2.bf16.msra.mxu0 0
    %231 = vmatprep.subr.bf16.mxu0 0
    %232 = vmatpush2.bf16.msra.mxu0 0
    %233 = vmatprep.mubr.bf16.mxu0 0
    %234 = vmatmul.mubr.bf16.gmra.mxu0 %v105
    %v235 = vpop.f32.mrf.mxu0
    %v236 = vadd.f32 %v66, %v235
    %v237 = vpop.f32.mrf.mxu0
    %v238 = vadd.f32 %v70, %v237
    %v239 = vpop.f32.mrf.mxu0
    %v240 = vadd.f32 %v66, %v239
    %v241 = vpop.f32.mrf.mxu0
    %v242 = vadd.f32 %v70, %v241
    %243 = vmatprep.mubr.bf16.mxu0 0
    %244 = vmatmul.mubr.bf16.gmra.mxu0 %v106
    %v245 = vpop.f32.mrf.mxu0
    %v246 = vadd.f32 %v66, %v245
    %v247 = vpop.f32.mrf.mxu0
    %v248 = vadd.f32 %v70, %v247
    %v249 = vpop.f32.mrf.mxu0
    %v250 = vadd.f32 %v66, %v249
    %v251 = vpop.f32.mrf.mxu0
    %v252 = vadd.f32 %v70, %v251
    %253 = vmatprep.mubr.bf16.mxu0 0
    %254 = vmatmul.mubr.bf16.gmra.mxu0 %v107
    %v255 = vpop.f32.mrf.mxu0
    %v256 = vadd.f32 %v66, %v255
    %v257 = vpop.f32.mrf.mxu0
    %v258 = vadd.f32 %v70, %v257
    %v259 = vpop.f32.mrf.mxu0
    %v260 = vadd.f32 %v66, %v259
    %v261 = vpop.f32.mrf.mxu0
    %v262 = vadd.f32 %v70, %v261
    %263 = vmatprep.mubr.bf16.mxu0 0
    %264 = vmatmul.mubr.bf16.gmra.mxu0 %v108
    %v265 = vpop.f32.mrf.mxu0
    %v266 = vadd.f32 %v66, %v265
    %v267 = vpop.f32.mrf.mxu0
    %v268 = vadd.f32 %v70, %v267
    %v269 = vpop.f32.mrf.mxu0
    %v270 = vadd.f32 %v66, %v269
    %v271 = vpop.f32.mrf.mxu0
    %v272 = vadd.f32 %v70, %v271
    %273 = vmatprep.mubr.bf16.mxu0 0
    %274 = vmatmul.mubr.bf16.gmra.mxu0 %v109
    %v275 = vpop.f32.mrf.mxu0
    %v276 = vadd.f32 %v66, %v275
    %v277 = vpop.f32.mrf.mxu0
    %v278 = vadd.f32 %v70, %v277
    %v279 = vpop.f32.mrf.mxu0
    %v280 = vadd.f32 %v66, %v279
    %v281 = vpop.f32.mrf.mxu0
    %v282 = vadd.f32 %v70, %v281
    %283 = vmatprep.mubr.bf16.mxu0 0
    %284 = vmatmul.mubr.bf16.gmra.mxu0 %v110
    %v285 = vpop.f32.mrf.mxu0
    %v286 = vadd.f32 %v66, %v285
    %v287 = vpop.f32.mrf.mxu0
    %v288 = vadd.f32 %v70, %v287
    %v289 = vpop.f32.mrf.mxu0
    %v290 = vadd.f32 %v66, %v289
    %v291 = vpop.f32.mrf.mxu0
    %v292 = vadd.f32 %v70, %v291
    %293 = vmatprep.mubr.bf16.mxu0 0
    %294 = vmatmul.mubr.bf16.gmra.mxu0 %v111
    %v295 = vpop.f32.mrf.mxu0
    %v296 = vadd.f32 %v66, %v295
    %v297 = vpop.f32.mrf.mxu0
    %v298 = vadd.f32 %v70, %v297
    %v299 = vpop.f32.mrf.mxu0
    %v300 = vadd.f32 %v66, %v299
    %v301 = vpop.f32.mrf.mxu0
    %v302 = vadd.f32 %v70, %v301
    %303 = vmatprep.mubr.bf16.mxu0 0
    %304 = vmatmul.mubr.bf16.gmra.mxu0 %v112
    %v305 = vpop.f32.mrf.mxu0
    %v306 = vadd.f32 %v66, %v305
    %v307 = vpop.f32.mrf.mxu0
    %v308 = vadd.f32 %v70, %v307
    %v309 = vpop.f32.mrf.mxu0
    %v310 = vadd.f32 %v66, %v309
    %v311 = vpop.f32.mrf.mxu0
    %v312 = vadd.f32 %v70, %v311
    %313 = vdwg.mxu0
    %v314 = vmax.f32 %v236, 0.0
    %v315 = vmax.f32 %v238, 0.0
    %v316 = vmax.f32 %v240, 0.0
    %v317 = vmax.f32 %v242, 0.0
    %v318 = vmax.f32 %v246, 0.0
    %v319 = vmax.f32 %v248, 0.0
    %v320 = vmax.f32 %v250, 0.0
    %v321 = vmax.f32 %v252, 0.0
    %v322 = vmax.f32 %v256, 0.0
    %v323 = vmax.f32 %v258, 0.0
    %v324 = vmax.f32 %v260, 0.0
    %v325 = vmax.f32 %v262, 0.0
    %v326 = vmax.f32 %v266, 0.0
    %v327 = vmax.f32 %v268, 0.0
    %v328 = vmax.f32 %v270, 0.0
    %v329 = vmax.f32 %v272, 0.0
    %v330 = vmax.f32 %v276, 0.0
    %v331 = vmax.f32 %v278, 0.0
    %v332 = vmax.f32 %v280, 0.0
    %v333 = vmax.f32 %v282, 0.0
    %v334 = vmax.f32 %v286, 0.0
    %v335 = vmax.f32 %v288, 0.0
    %v336 = vmax.f32 %v290, 0.0
    %v337 = vmax.f32 %v292, 0.0
    %v338 = vmax.f32 %v296, 0.0
    %v339 = vmax.f32 %v298, 0.0
    %v340 = vmax.f32 %v300, 0.0
    %v341 = vmax.f32 %v302, 0.0
    %v342 = vmax.f32 %v306, 0.0
    %v343 = vmax.f32 %v308, 0.0
    %v344 = vmax.f32 %v310, 0.0
    %v345 = vmax.f32 %v312, 0.0
    %v346 = vpack.c.bf16 %v316, %v314
    %v347 = vpack.c.bf16 %v317, %v315
    %v348 = vpack.c.bf16 %v320, %v318
    %v349 = vpack.c.bf16 %v321, %v319
    %v350 = vpack.c.bf16 %v324, %v322
    %v351 = vpack.c.bf16 %v325, %v323
    %v352 = vpack.c.bf16 %v328, %v326
    %v353 = vpack.c.bf16 %v329, %v327
    %v354 = vpack.c.bf16 %v332, %v330
    %v355 = vpack.c.bf16 %v333, %v331
    %v356 = vpack.c.bf16 %v336, %v334
    %v357 = vpack.c.bf16 %v337, %v335
    %v358 = vpack.c.bf16 %v340, %v338
    %v359 = vpack.c.bf16 %v341, %v339
    %v360 = vpack.c.bf16 %v344, %v342
    %v361 = vpack.c.bf16 %v345, %v343
    %v362 = vld [vmem:[#allocation2 + $0x80] sm:$0xff]
    %v363 = vld [vmem:[#allocation2 + $0x88] sm:$0xff]
    %v364 = vld [vmem:[#allocation2 + $0x90] sm:$0xff]
    %v365 = vld [vmem:[#allocation2 + $0x98] sm:$0xff]
    %v366 = vld [vmem:[#allocation2 + $0xa0] sm:$0xff]
    %v367 = vld [vmem:[#allocation2 + $0xa8] sm:$0xff]
    %v368 = vld [vmem:[#allocation2 + $0xb0] sm:$0xff]
    %v369 = vld [vmem:[#allocation2 + $0xb8] sm:$0xff]
    %v370 = vld [vmem:[#allocation2 + $0xc0] sm:$0xff]
    %v371 = vld [vmem:[#allocation2 + $0xc8] sm:$0xff]
    %v372 = vld [vmem:[#allocation2 + $0xd0] sm:$0xff]
    %v373 = vld [vmem:[#allocation2 + $0xd8] sm:$0xff]
    %v374 = vld [vmem:[#allocation2 + $0xe0] sm:$0xff]
    %v375 = vld [vmem:[#allocation2 + $0xe8] sm:$0xff]
    %v376 = vld [vmem:[#allocation2 + $0xf0] sm:$0xff]
    %v377 = vld [vmem:[#allocation2 + $0xf8] sm:$0xff]
    %v378 = vld [vmem:[#allocation2 + $0x100] sm:$0xff]
    %v379 = vld [vmem:[#allocation2 + $0x108] sm:$0xff]
    %v380 = vld [vmem:[#allocation2 + $0x110] sm:$0xff]
    %v381 = vld [vmem:[#allocation2 + $0x118] sm:$0xff]
    %v382 = vld [vmem:[#allocation2 + $0x120] sm:$0xff]
    %v383 = vld [vmem:[#allocation2 + $0x128] sm:$0xff]
    %v384 = vld [vmem:[#allocation2 + $0x130] sm:$0xff]
    %v385 = vld [vmem:[#allocation2 + $0x138] sm:$0xff]
    %v386 = vld [vmem:[#allocation2 + $0x140] sm:$0xff]
    %v387 = vld [vmem:[#allocation2 + $0x148] sm:$0xff]
    %v388 = vld [vmem:[#allocation2 + $0x150] sm:$0xff]
    %v389 = vld [vmem:[#allocation2 + $0x158] sm:$0xff]
    %v390 = vld [vmem:[#allocation2 + $0x160] sm:$0xff]
    %v391 = vld [vmem:[#allocation2 + $0x168] sm:$0xff]
    %v392 = vld [vmem:[#allocation2 + $0x170] sm:$0xff]
    %v393 = vld [vmem:[#allocation2 + $0x178] sm:$0xff]
    %s394 = scalar_lea.vmem %s2, 1
    %v395 = vld [vmem:[%s394] ss:$8 sm:$0x3]
    %v397 = vlaneseq
    %v398 = vshrl.u32 %v397, 7
    %v399 = vsub.s32 0, %v398
    %v400 = vrot.slane %v395, %v399
    %v401 = vlaneseq
    %v402 = vshrl.u32 %v401, 7
    %v403 = vsub.s32 1, %v402
    %v404 = vrot.slane %v395, %v403
    %v439 = vunpack.c.l.b16 %v362
    %v440 = vunpack.c.h.b16 %v362
    %v441 = vunpack.c.l.b16 %v363
    %v442 = vunpack.c.h.b16 %v363
    %v443 = vunpack.c.l.b16 %v364
    %v444 = vunpack.c.h.b16 %v364
    %v445 = vunpack.c.l.b16 %v365
    %v446 = vunpack.c.h.b16 %v365
    %v447 = vunpack.c.l.b16 %v366
    %v448 = vunpack.c.h.b16 %v366
    %v449 = vunpack.c.l.b16 %v367
    %v450 = vunpack.c.h.b16 %v367
    %v451 = vunpack.c.l.b16 %v368
    %v452 = vunpack.c.h.b16 %v368
    %v453 = vunpack.c.l.b16 %v369
    %v454 = vunpack.c.h.b16 %v369
    %v455 = vunpack.c.l.b16 %v370
    %v456 = vunpack.c.h.b16 %v370
    %v457 = vunpack.c.l.b16 %v371
    %v458 = vunpack.c.h.b16 %v371
    %v459 = vunpack.c.l.b16 %v372
    %v460 = vunpack.c.h.b16 %v372
    %v461 = vunpack.c.l.b16 %v373
    %v462 = vunpack.c.h.b16 %v373
    %v463 = vunpack.c.l.b16 %v374
    %v464 = vunpack.c.h.b16 %v374
    %v465 = vunpack.c.l.b16 %v375
    %v466 = vunpack.c.h.b16 %v375
    %v467 = vunpack.c.l.b16 %v376
    %v468 = vunpack.c.h.b16 %v376
    %v469 = vunpack.c.l.b16 %v377
    %v470 = vunpack.c.h.b16 %v377
    %v471 = vunpack.c.l.b16 %v378
    %v472 = vunpack.c.h.b16 %v378
    %v473 = vunpack.c.l.b16 %v379
    %v474 = vunpack.c.h.b16 %v379
    %v475 = vunpack.c.l.b16 %v380
    %v476 = vunpack.c.h.b16 %v380
    %v477 = vunpack.c.l.b16 %v381
    %v478 = vunpack.c.h.b16 %v381
    %v479 = vunpack.c.l.b16 %v382
    %v480 = vunpack.c.h.b16 %v382
    %v481 = vunpack.c.l.b16 %v383
    %v482 = vunpack.c.h.b16 %v383
    %v483 = vunpack.c.l.b16 %v384
    %v484 = vunpack.c.h.b16 %v384
    %v485 = vunpack.c.l.b16 %v385
    %v486 = vunpack.c.h.b16 %v385
    %v487 = vunpack.c.l.b16 %v386
    %v488 = vunpack.c.h.b16 %v386
    %v489 = vunpack.c.l.b16 %v387
    %v490 = vunpack.c.h.b16 %v387
    %v491 = vunpack.c.l.b16 %v388
    %v492 = vunpack.c.h.b16 %v388
    %v493 = vunpack.c.l.b16 %v389
    %v494 = vunpack.c.h.b16 %v389
    %v495 = vunpack.c.l.b16 %v390
    %v496 = vunpack.c.h.b16 %v390
    %v497 = vunpack.c.l.b16 %v391
    %v498 = vunpack.c.h.b16 %v391
    %v499 = vunpack.c.l.b16 %v392
    %v500 = vunpack.c.h.b16 %v392
    %v501 = vunpack.c.l.b16 %v393
    %v502 = vunpack.c.h.b16 %v393
    %v503 = vpack.c.b16 %v441, %v439
    %v504 = vpack.c.b16 %v442, %v440
    %v505 = vpack.c.b16 %v445, %v443
    %v506 = vpack.c.b16 %v446, %v444
    %v507 = vpack.c.b16 %v449, %v447
    %v508 = vpack.c.b16 %v450, %v448
    %v509 = vpack.c.b16 %v453, %v451
    %v510 = vpack.c.b16 %v454, %v452
    %v511 = vpack.c.b16 %v457, %v455
    %v512 = vpack.c.b16 %v458, %v456
    %v513 = vpack.c.b16 %v461, %v459
    %v514 = vpack.c.b16 %v462, %v460
    %v515 = vpack.c.b16 %v465, %v463
    %v516 = vpack.c.b16 %v466, %v464
    %v517 = vpack.c.b16 %v469, %v467
    %v518 = vpack.c.b16 %v470, %v468
    %v519 = vpack.c.b16 %v473, %v471
    %v520 = vpack.c.b16 %v474, %v472
    %v521 = vpack.c.b16 %v477, %v475
    %v522 = vpack.c.b16 %v478, %v476
    %v523 = vpack.c.b16 %v481, %v479
    %v524 = vpack.c.b16 %v482, %v480
    %v525 = vpack.c.b16 %v485, %v483
    %v526 = vpack.c.b16 %v486, %v484
    %v527 = vpack.c.b16 %v489, %v487
    %v528 = vpack.c.b16 %v490, %v488
    %v529 = vpack.c.b16 %v493, %v491
    %v530 = vpack.c.b16 %v494, %v492
    %v531 = vpack.c.b16 %v497, %v495
    %v532 = vpack.c.b16 %v498, %v496
    %v533 = vpack.c.b16 %v501, %v499
    %v534 = vpack.c.b16 %v502, %v500
    %567 = vmatprep.subr.bf16.mxu0 %v518
    %568 = vmatpush1.bf16.msra.mxu0 %v517
    %569 = vmatprep.subr.bf16.mxu0 %v516
    %570 = vmatpush1.bf16.msra.mxu0 %v515
    %571 = vmatprep.subr.bf16.mxu0 %v514
    %572 = vmatpush1.bf16.msra.mxu0 %v513
    %573 = vmatprep.subr.bf16.mxu0 %v512
    %574 = vmatpush1.bf16.msra.mxu0 %v511
    %575 = vmatprep.subr.bf16.mxu0 %v510
    %576 = vmatpush1.bf16.msra.mxu0 %v509
    %577 = vmatprep.subr.bf16.mxu0 %v508
    %578 = vmatpush1.bf16.msra.mxu0 %v507
    %579 = vmatprep.subr.bf16.mxu0 %v506
    %580 = vmatpush1.bf16.msra.mxu0 %v505
    %581 = vmatprep.subr.bf16.mxu0 %v504
    %582 = vmatpush1.bf16.msra.mxu0 %v503
    %583 = vmatprep.subr.bf16.mxu0 %v534
    %584 = vmatpush2.bf16.msra.mxu0 %v533
    %585 = vmatprep.subr.bf16.mxu0 %v532
    %586 = vmatpush2.bf16.msra.mxu0 %v531
    %587 = vmatprep.subr.bf16.mxu0 %v530
    %588 = vmatpush2.bf16.msra.mxu0 %v529
    %589 = vmatprep.subr.bf16.mxu0 %v528
    %590 = vmatpush2.bf16.msra.mxu0 %v527
    %591 = vmatprep.subr.bf16.mxu0 %v526
    %592 = vmatpush2.bf16.msra.mxu0 %v525
    %593 = vmatprep.subr.bf16.mxu0 %v524
    %594 = vmatpush2.bf16.msra.mxu0 %v523
    %595 = vmatprep.subr.bf16.mxu0 %v522
    %596 = vmatpush2.bf16.msra.mxu0 %v521
    %597 = vmatprep.subr.bf16.mxu0 %v520
    %598 = vmatpush2.bf16.msra.mxu0 %v519
    %599 = vmatprep.mubr.bf16.mxu0 %v347
    %600 = vmatmul.mubr.bf16.gmra.mxu0 %v346
    %v601 = vpop.f32.mrf.mxu0
    %v602 = vadd.f32 %v400, %v601
    %v603 = vpop.f32.mrf.mxu0
    %v604 = vadd.f32 %v404, %v603
    %v605 = vpop.f32.mrf.mxu0
    %v606 = vadd.f32 %v400, %v605
    %v607 = vpop.f32.mrf.mxu0
    %v608 = vadd.f32 %v404, %v607
    %609 = vmatprep.mubr.bf16.mxu0 %v349
    %610 = vmatmul.mubr.bf16.gmra.mxu0 %v348
    %v611 = vpop.f32.mrf.mxu0
    %v612 = vadd.f32 %v400, %v611
    %v613 = vpop.f32.mrf.mxu0
    %v614 = vadd.f32 %v404, %v613
    %v615 = vpop.f32.mrf.mxu0
    %v616 = vadd.f32 %v400, %v615
    %v617 = vpop.f32.mrf.mxu0
    %v618 = vadd.f32 %v404, %v617
    %619 = vmatprep.mubr.bf16.mxu0 %v351
    %620 = vmatmul.mubr.bf16.gmra.mxu0 %v350
    %v621 = vpop.f32.mrf.mxu0
    %v622 = vadd.f32 %v400, %v621
    %v623 = vpop.f32.mrf.mxu0
    %v624 = vadd.f32 %v404, %v623
    %v625 = vpop.f32.mrf.mxu0
    %v626 = vadd.f32 %v400, %v625
    %v627 = vpop.f32.mrf.mxu0
    %v628 = vadd.f32 %v404, %v627
    %629 = vmatprep.mubr.bf16.mxu0 %v353
    %630 = vmatmul.mubr.bf16.gmra.mxu0 %v352
    %v631 = vpop.f32.mrf.mxu0
    %v632 = vadd.f32 %v400, %v631
    %v633 = vpop.f32.mrf.mxu0
    %v634 = vadd.f32 %v404, %v633
    %v635 = vpop.f32.mrf.mxu0
    %v636 = vadd.f32 %v400, %v635
    %v637 = vpop.f32.mrf.mxu0
    %v638 = vadd.f32 %v404, %v637
    %639 = vmatprep.mubr.bf16.mxu0 %v355
    %640 = vmatmul.mubr.bf16.gmra.mxu0 %v354
    %v641 = vpop.f32.mrf.mxu0
    %v642 = vadd.f32 %v400, %v641
    %v643 = vpop.f32.mrf.mxu0
    %v644 = vadd.f32 %v404, %v643
    %v645 = vpop.f32.mrf.mxu0
    %v646 = vadd.f32 %v400, %v645
    %v647 = vpop.f32.mrf.mxu0
    %v648 = vadd.f32 %v404, %v647
    %649 = vmatprep.mubr.bf16.mxu0 %v357
    %650 = vmatmul.mubr.bf16.gmra.mxu0 %v356
    %v651 = vpop.f32.mrf.mxu0
    %v652 = vadd.f32 %v400, %v651
    %v653 = vpop.f32.mrf.mxu0
    %v654 = vadd.f32 %v404, %v653
    %v655 = vpop.f32.mrf.mxu0
    %v656 = vadd.f32 %v400, %v655
    %v657 = vpop.f32.mrf.mxu0
    %v658 = vadd.f32 %v404, %v657
    %659 = vmatprep.mubr.bf16.mxu0 %v359
    %660 = vmatmul.mubr.bf16.gmra.mxu0 %v358
    %v661 = vpop.f32.mrf.mxu0
    %v662 = vadd.f32 %v400, %v661
    %v663 = vpop.f32.mrf.mxu0
    %v664 = vadd.f32 %v404, %v663
    %v665 = vpop.f32.mrf.mxu0
    %v666 = vadd.f32 %v400, %v665
    %v667 = vpop.f32.mrf.mxu0
    %v668 = vadd.f32 %v404, %v667
    %669 = vmatprep.mubr.bf16.mxu0 %v361
    %670 = vmatmul.mubr.bf16.gmra.mxu0 %v360
    %v671 = vpop.f32.mrf.mxu0
    %v672 = vadd.f32 %v400, %v671
    %v673 = vpop.f32.mrf.mxu0
    %v674 = vadd.f32 %v404, %v673
    %v675 = vpop.f32.mrf.mxu0
    %v676 = vadd.f32 %v400, %v675
    %v677 = vpop.f32.mrf.mxu0
    %v678 = vadd.f32 %v404, %v677
    %679 = vdwg.mxu0
    %v680 = vmax.f32 %v602, 0.0
    %v681 = vmax.f32 %v604, 0.0
    %v682 = vmax.f32 %v606, 0.0
    %v683 = vmax.f32 %v608, 0.0
    %v684 = vmax.f32 %v612, 0.0
    %v685 = vmax.f32 %v614, 0.0
    %v686 = vmax.f32 %v616, 0.0
    %v687 = vmax.f32 %v618, 0.0
    %v688 = vmax.f32 %v622, 0.0
    %v689 = vmax.f32 %v624, 0.0
    %v690 = vmax.f32 %v626, 0.0
    %v691 = vmax.f32 %v628, 0.0
    %v692 = vmax.f32 %v632, 0.0
    %v693 = vmax.f32 %v634, 0.0
    %v694 = vmax.f32 %v636, 0.0
    %v695 = vmax.f32 %v638, 0.0
    %v696 = vmax.f32 %v642, 0.0
    %v697 = vmax.f32 %v644, 0.0
    %v698 = vmax.f32 %v646, 0.0
    %v699 = vmax.f32 %v648, 0.0
    %v700 = vmax.f32 %v652, 0.0
    %v701 = vmax.f32 %v654, 0.0
    %v702 = vmax.f32 %v656, 0.0
    %v703 = vmax.f32 %v658, 0.0
    %v704 = vmax.f32 %v662, 0.0
    %v705 = vmax.f32 %v664, 0.0
    %v706 = vmax.f32 %v666, 0.0
    %v707 = vmax.f32 %v668, 0.0
    %v708 = vmax.f32 %v672, 0.0
    %v709 = vmax.f32 %v674, 0.0
    %v710 = vmax.f32 %v676, 0.0
    %v711 = vmax.f32 %v678, 0.0
    %v712 = vpack.c.bf16 %v682, %v680
    %v713 = vpack.c.bf16 %v683, %v681
    %v714 = vpack.c.bf16 %v686, %v684
    %v715 = vpack.c.bf16 %v687, %v685
    %v716 = vpack.c.bf16 %v690, %v688
    %v717 = vpack.c.bf16 %v691, %v689
    %v718 = vpack.c.bf16 %v694, %v692
    %v719 = vpack.c.bf16 %v695, %v693
    %v720 = vpack.c.bf16 %v698, %v696
    %v721 = vpack.c.bf16 %v699, %v697
    %v722 = vpack.c.bf16 %v702, %v700
    %v723 = vpack.c.bf16 %v703, %v701
    %v724 = vpack.c.bf16 %v706, %v704
    %v725 = vpack.c.bf16 %v707, %v705
    %v726 = vpack.c.bf16 %v710, %v708
    %v727 = vpack.c.bf16 %v711, %v709
    %v728 = vld [vmem:[#allocation2 + $0x180] sm:$0xf]
    %v729 = vld [vmem:[#allocation2 + $0x188] sm:$0xf]
    %v730 = vld [vmem:[#allocation2 + $0x190] sm:$0xf]
    %v731 = vld [vmem:[#allocation2 + $0x198] sm:$0xf]
    %v732 = vld [vmem:[#allocation2 + $0x1a0] sm:$0xf]
    %v733 = vld [vmem:[#allocation2 + $0x1a8] sm:$0xf]
    %v734 = vld [vmem:[#allocation2 + $0x1b0] sm:$0xf]
    %v735 = vld [vmem:[#allocation2 + $0x1b8] sm:$0xf]
    %v736 = vld [vmem:[#allocation2 + $0x1c0] sm:$0xf]
    %v737 = vld [vmem:[#allocation2 + $0x1c8] sm:$0xf]
    %v738 = vld [vmem:[#allocation2 + $0x1d0] sm:$0xf]
    %v739 = vld [vmem:[#allocation2 + $0x1d8] sm:$0xf]
    %v740 = vld [vmem:[#allocation2 + $0x1e0] sm:$0xf]
    %v741 = vld [vmem:[#allocation2 + $0x1e8] sm:$0xf]
    %v742 = vld [vmem:[#allocation2 + $0x1f0] sm:$0xf]
    %v743 = vld [vmem:[#allocation2 + $0x1f8] sm:$0xf]
    %v744 = vld [vmem:[#allocation2 + $0x200] sm:$0xf]
    %v745 = vld [vmem:[#allocation2 + $0x208] sm:$0xf]
    %v746 = vld [vmem:[#allocation2 + $0x210] sm:$0xf]
    %v747 = vld [vmem:[#allocation2 + $0x218] sm:$0xf]
    %v748 = vld [vmem:[#allocation2 + $0x220] sm:$0xf]
    %v749 = vld [vmem:[#allocation2 + $0x228] sm:$0xf]
    %v750 = vld [vmem:[#allocation2 + $0x230] sm:$0xf]
    %v751 = vld [vmem:[#allocation2 + $0x238] sm:$0xf]
    %v752 = vld [vmem:[#allocation2 + $0x240] sm:$0xf]
    %v753 = vld [vmem:[#allocation2 + $0x248] sm:$0xf]
    %v754 = vld [vmem:[#allocation2 + $0x250] sm:$0xf]
    %v755 = vld [vmem:[#allocation2 + $0x258] sm:$0xf]
    %v756 = vld [vmem:[#allocation2 + $0x260] sm:$0xf]
    %v757 = vld [vmem:[#allocation2 + $0x268] sm:$0xf]
    %v758 = vld [vmem:[#allocation2 + $0x270] sm:$0xf]
    %v759 = vld [vmem:[#allocation2 + $0x278] sm:$0xf]
    %v760 = vld [vmem:[%s2 + $0x2] ss:$0 sm:$0xff]
    %v793 = vunpack.c.l.b16 %v728
    %v794 = vunpack.c.l.b16 %v729
    %v795 = vunpack.c.l.b16 %v730
    %v796 = vunpack.c.l.b16 %v731
    %v797 = vunpack.c.l.b16 %v732
    %v798 = vunpack.c.l.b16 %v733
    %v799 = vunpack.c.l.b16 %v734
    %v800 = vunpack.c.l.b16 %v735
    %v801 = vunpack.c.l.b16 %v736
    %v802 = vunpack.c.l.b16 %v737
    %v803 = vunpack.c.l.b16 %v738
    %v804 = vunpack.c.l.b16 %v739
    %v805 = vunpack.c.l.b16 %v740
    %v806 = vunpack.c.l.b16 %v741
    %v807 = vunpack.c.l.b16 %v742
    %v808 = vunpack.c.l.b16 %v743
    %v809 = vunpack.c.l.b16 %v744
    %v810 = vunpack.c.l.b16 %v745
    %v811 = vunpack.c.l.b16 %v746
    %v812 = vunpack.c.l.b16 %v747
    %v813 = vunpack.c.l.b16 %v748
    %v814 = vunpack.c.l.b16 %v749
    %v815 = vunpack.c.l.b16 %v750
    %v816 = vunpack.c.l.b16 %v751
    %v817 = vunpack.c.l.b16 %v752
    %v818 = vunpack.c.l.b16 %v753
    %v819 = vunpack.c.l.b16 %v754
    %v820 = vunpack.c.l.b16 %v755
    %v821 = vunpack.c.l.b16 %v756
    %v822 = vunpack.c.l.b16 %v757
    %v823 = vunpack.c.l.b16 %v758
    %v824 = vunpack.c.l.b16 %v759
    %v825 = vpack.c.b16 %v794, %v793
    %v826 = vpack.c.b16 %v796, %v795
    %v827 = vpack.c.b16 %v798, %v797
    %v828 = vpack.c.b16 %v800, %v799
    %v829 = vpack.c.b16 %v802, %v801
    %v830 = vpack.c.b16 %v804, %v803
    %v831 = vpack.c.b16 %v806, %v805
    %v832 = vpack.c.b16 %v808, %v807
    %v833 = vpack.c.b16 %v810, %v809
    %v834 = vpack.c.b16 %v812, %v811
    %v835 = vpack.c.b16 %v814, %v813
    %v836 = vpack.c.b16 %v816, %v815
    %v837 = vpack.c.b16 %v818, %v817
    %v838 = vpack.c.b16 %v820, %v819
    %v839 = vpack.c.b16 %v822, %v821
    %v840 = vpack.c.b16 %v824, %v823
    %857 = vmatprep.subr.bf16.mxu0 0
    %858 = vmatpush1.bf16.msra.mxu0 %v832
    %859 = vmatprep.subr.bf16.mxu0 0
    %860 = vmatpush1.bf16.msra.mxu0 %v831
    %861 = vmatprep.subr.bf16.mxu0 0
    %862 = vmatpush1.bf16.msra.mxu0 %v830
    %863 = vmatprep.subr.bf16.mxu0 0
    %864 = vmatpush1.bf16.msra.mxu0 %v829
    %865 = vmatprep.subr.bf16.mxu0 0
    %866 = vmatpush1.bf16.msra.mxu0 %v828
    %867 = vmatprep.subr.bf16.mxu0 0
    %868 = vmatpush1.bf16.msra.mxu0 %v827
    %869 = vmatprep.subr.bf16.mxu0 0
    %870 = vmatpush1.bf16.msra.mxu0 %v826
    %871 = vmatprep.subr.bf16.mxu0 0
    %872 = vmatpush1.bf16.msra.mxu0 %v825
    %873 = vmatprep.subr.bf16.mxu0 0
    %874 = vmatpush2.bf16.msra.mxu0 %v840
    %875 = vmatprep.subr.bf16.mxu0 0
    %876 = vmatpush2.bf16.msra.mxu0 %v839
    %877 = vmatprep.subr.bf16.mxu0 0
    %878 = vmatpush2.bf16.msra.mxu0 %v838
    %879 = vmatprep.subr.bf16.mxu0 0
    %880 = vmatpush2.bf16.msra.mxu0 %v837
    %881 = vmatprep.subr.bf16.mxu0 0
    %882 = vmatpush2.bf16.msra.mxu0 %v836
    %883 = vmatprep.subr.bf16.mxu0 0
    %884 = vmatpush2.bf16.msra.mxu0 %v835
    %885 = vmatprep.subr.bf16.mxu0 0
    %886 = vmatpush2.bf16.msra.mxu0 %v834
    %887 = vmatprep.subr.bf16.mxu0 0
    %888 = vmatpush2.bf16.msra.mxu0 %v833
    %889 = vmatprep.mubr.bf16.mxu0 %v713
    %890 = vmatmul.mubr.bf16.gmra.mxu0 %v712
    %v891 = vpop.f32.mrf.mxu0
    %v892 = vadd.f32 %v760, %v891
    %v893 = vpop.f32.mrf.mxu0
    %v894 = vpop.f32.mrf.mxu0
    %v895 = vadd.f32 %v760, %v894
    %v896 = vpop.f32.mrf.mxu0
    %897 = vmatprep.mubr.bf16.mxu0 %v715
    %898 = vmatmul.mubr.bf16.gmra.mxu0 %v714
    %v899 = vpop.f32.mrf.mxu0
    %v900 = vadd.f32 %v760, %v899
    %v901 = vpop.f32.mrf.mxu0
    %v902 = vpop.f32.mrf.mxu0
    %v903 = vadd.f32 %v760, %v902
    %v904 = vpop.f32.mrf.mxu0
    %905 = vmatprep.mubr.bf16.mxu0 %v717
    %906 = vmatmul.mubr.bf16.gmra.mxu0 %v716
    %v907 = vpop.f32.mrf.mxu0
    %v908 = vadd.f32 %v760, %v907
    %v909 = vpop.f32.mrf.mxu0
    %v910 = vpop.f32.mrf.mxu0
    %v911 = vadd.f32 %v760, %v910
    %v912 = vpop.f32.mrf.mxu0
    %913 = vmatprep.mubr.bf16.mxu0 %v719
    %914 = vmatmul.mubr.bf16.gmra.mxu0 %v718
    %v915 = vpop.f32.mrf.mxu0
    %v916 = vadd.f32 %v760, %v915
    %v917 = vpop.f32.mrf.mxu0
    %v918 = vpop.f32.mrf.mxu0
    %v919 = vadd.f32 %v760, %v918
    %v920 = vpop.f32.mrf.mxu0
    %921 = vmatprep.mubr.bf16.mxu0 %v721
    %922 = vmatmul.mubr.bf16.gmra.mxu0 %v720
    %v923 = vpop.f32.mrf.mxu0
    %v924 = vadd.f32 %v760, %v923
    %v925 = vpop.f32.mrf.mxu0
    %v926 = vpop.f32.mrf.mxu0
    %v927 = vadd.f32 %v760, %v926
    %v928 = vpop.f32.mrf.mxu0
    %929 = vmatprep.mubr.bf16.mxu0 %v723
    %930 = vmatmul.mubr.bf16.gmra.mxu0 %v722
    %v931 = vpop.f32.mrf.mxu0
    %v932 = vadd.f32 %v760, %v931
    %v933 = vpop.f32.mrf.mxu0
    %v934 = vpop.f32.mrf.mxu0
    %v935 = vadd.f32 %v760, %v934
    %v936 = vpop.f32.mrf.mxu0
    %937 = vmatprep.mubr.bf16.mxu0 %v725
    %938 = vmatmul.mubr.bf16.gmra.mxu0 %v724
    %v939 = vpop.f32.mrf.mxu0
    %v940 = vadd.f32 %v760, %v939
    %v941 = vpop.f32.mrf.mxu0
    %v942 = vpop.f32.mrf.mxu0
    %v943 = vadd.f32 %v760, %v942
    %v944 = vpop.f32.mrf.mxu0
    %945 = vmatprep.mubr.bf16.mxu0 %v727
    %946 = vmatmul.mubr.bf16.gmra.mxu0 %v726
    %v947 = vpop.f32.mrf.mxu0
    %v948 = vadd.f32 %v760, %v947
    %v949 = vpop.f32.mrf.mxu0
    %v950 = vpop.f32.mrf.mxu0
    %v951 = vadd.f32 %v760, %v950
    %v952 = vpop.f32.mrf.mxu0
    %953 = vdwg.mxu0
    %v954 = vmax.f32 %v892, 0.0
    %v955 = vmax.f32 %v895, 0.0
    %v956 = vmax.f32 %v900, 0.0
    %v957 = vmax.f32 %v903, 0.0
    %v958 = vmax.f32 %v908, 0.0
    %v959 = vmax.f32 %v911, 0.0
    %v960 = vmax.f32 %v916, 0.0
    %v961 = vmax.f32 %v919, 0.0
    %v962 = vmax.f32 %v924, 0.0
    %v963 = vmax.f32 %v927, 0.0
    %v964 = vmax.f32 %v932, 0.0
    %v965 = vmax.f32 %v935, 0.0
    %v966 = vmax.f32 %v940, 0.0
    %v967 = vmax.f32 %v943, 0.0
    %v968 = vmax.f32 %v948, 0.0
    %v969 = vmax.f32 %v951, 0.0
    %v970 = vpack.c.bf16 %v955, %v954
    %v971 = vpack.c.bf16 %v957, %v956
    %v972 = vpack.c.bf16 %v959, %v958
    %v973 = vpack.c.bf16 %v961, %v960
    %v974 = vpack.c.bf16 %v963, %v962
    %v975 = vpack.c.bf16 %v965, %v964
    %v976 = vpack.c.bf16 %v967, %v966
    %v977 = vpack.c.bf16 %v969, %v968
    %v978 = vld [vmem:[#allocation2 + $0x280] sm:$0xf]
    %v979 = vld [vmem:[#allocation2 + $0x288] sm:$0xf]
    %v980 = vld [vmem:[#allocation2 + $0x290] sm:$0xf]
    %v981 = vld [vmem:[#allocation2 + $0x298] sm:$0xf]
    %v982 = vld [vmem:[#allocation2 + $0x2a0] sm:$0xf]
    %v983 = vld [vmem:[#allocation2 + $0x2a8] sm:$0xf]
    %v984 = vld [vmem:[#allocation2 + $0x2b0] sm:$0xf]
    %v985 = vld [vmem:[#allocation2 + $0x2b8] sm:$0xf]
    %v986 = vld [vmem:[#allocation2 + $0x2c0] sm:$0xf]
    %v987 = vld [vmem:[#allocation2 + $0x2c8] sm:$0xf]
    %v988 = vld [vmem:[#allocation2 + $0x2d0] sm:$0xf]
    %v989 = vld [vmem:[#allocation2 + $0x2d8] sm:$0xf]
    %v990 = vld [vmem:[#allocation2 + $0x2e0] sm:$0xf]
    %v991 = vld [vmem:[#allocation2 + $0x2e8] sm:$0xf]
    %v992 = vld [vmem:[#allocation2 + $0x2f0] sm:$0xf]
    %v993 = vld [vmem:[#allocation2 + $0x2f8] sm:$0xf]
    %v994 = vld [vmem:[%s2 + $0x3] ss:$0 sm:$0xff]
    %v1011 = vunpack.c.l.b16 %v978
    %v1012 = vunpack.c.l.b16 %v979
    %v1013 = vunpack.c.l.b16 %v980
    %v1014 = vunpack.c.l.b16 %v981
    %v1015 = vunpack.c.l.b16 %v982
    %v1016 = vunpack.c.l.b16 %v983
    %v1017 = vunpack.c.l.b16 %v984
    %v1018 = vunpack.c.l.b16 %v985
    %v1019 = vunpack.c.l.b16 %v986
    %v1020 = vunpack.c.l.b16 %v987
    %v1021 = vunpack.c.l.b16 %v988
    %v1022 = vunpack.c.l.b16 %v989
    %v1023 = vunpack.c.l.b16 %v990
    %v1024 = vunpack.c.l.b16 %v991
    %v1025 = vunpack.c.l.b16 %v992
    %v1026 = vunpack.c.l.b16 %v993
    %v1027 = vpack.c.b16 %v1012, %v1011
    %v1028 = vpack.c.b16 %v1014, %v1013
    %v1029 = vpack.c.b16 %v1016, %v1015
    %v1030 = vpack.c.b16 %v1018, %v1017
    %v1031 = vpack.c.b16 %v1020, %v1019
    %v1032 = vpack.c.b16 %v1022, %v1021
    %v1033 = vpack.c.b16 %v1024, %v1023
    %v1034 = vpack.c.b16 %v1026, %v1025
    %1043 = vmatprep.subr.bf16.mxu0 0
    %1044 = vmatpush1.bf16.msra.mxu0 %v1034
    %1045 = vmatprep.subr.bf16.mxu0 0
    %1046 = vmatpush1.bf16.msra.mxu0 %v1033
    %1047 = vmatprep.subr.bf16.mxu0 0
    %1048 = vmatpush1.bf16.msra.mxu0 %v1032
    %1049 = vmatprep.subr.bf16.mxu0 0
    %1050 = vmatpush1.bf16.msra.mxu0 %v1031
    %1051 = vmatprep.subr.bf16.mxu0 0
    %1052 = vmatpush1.bf16.msra.mxu0 %v1030
    %1053 = vmatprep.subr.bf16.mxu0 0
    %1054 = vmatpush1.bf16.msra.mxu0 %v1029
    %1055 = vmatprep.subr.bf16.mxu0 0
    %1056 = vmatpush1.bf16.msra.mxu0 %v1028
    %1057 = vmatprep.subr.bf16.mxu0 0
    %1058 = vmatpush1.bf16.msra.mxu0 %v1027
    %1059 = vmatprep.subr.bf16.mxu0 0
    %1060 = vmatpush2.bf16.msra.mxu0 0
    %1061 = vmatprep.subr.bf16.mxu0 0
    %1062 = vmatpush2.bf16.msra.mxu0 0
    %1063 = vmatprep.subr.bf16.mxu0 0
    %1064 = vmatpush2.bf16.msra.mxu0 0
    %1065 = vmatprep.subr.bf16.mxu0 0
    %1066 = vmatpush2.bf16.msra.mxu0 0
    %1067 = vmatprep.subr.bf16.mxu0 0
    %1068 = vmatpush2.bf16.msra.mxu0 0
    %1069 = vmatprep.subr.bf16.mxu0 0
    %1070 = vmatpush2.bf16.msra.mxu0 0
    %1071 = vmatprep.subr.bf16.mxu0 0
    %1072 = vmatpush2.bf16.msra.mxu0 0
    %1073 = vmatprep.subr.bf16.mxu0 0
    %1074 = vmatpush2.bf16.msra.mxu0 0
    %1075 = vmatprep.mubr.bf16.mxu0 0
    %1076 = vmatmul.mubr.bf16.gmra.mxu0 %v970
    %v1077 = vpop.f32.mrf.mxu0
    %v1078 = vadd.f32 %v994, %v1077
    %v1079 = vpop.f32.mrf.mxu0
    %v1080 = vpop.f32.mrf.mxu0
    %v1081 = vadd.f32 %v994, %v1080
    %v1082 = vpop.f32.mrf.mxu0
    %1083 = vmatprep.mubr.bf16.mxu0 0
    %1084 = vmatmul.mubr.bf16.gmra.mxu0 %v971
    %v1085 = vpop.f32.mrf.mxu0
    %v1086 = vadd.f32 %v994, %v1085
    %v1087 = vpop.f32.mrf.mxu0
    %v1088 = vpop.f32.mrf.mxu0
    %v1089 = vadd.f32 %v994, %v1088
    %v1090 = vpop.f32.mrf.mxu0
    %1091 = vmatprep.mubr.bf16.mxu0 0
    %1092 = vmatmul.mubr.bf16.gmra.mxu0 %v972
    %v1093 = vpop.f32.mrf.mxu0
    %v1094 = vadd.f32 %v994, %v1093
    %v1095 = vpop.f32.mrf.mxu0
    %v1096 = vpop.f32.mrf.mxu0
    %v1097 = vadd.f32 %v994, %v1096
    %v1098 = vpop.f32.mrf.mxu0
    %1099 = vmatprep.mubr.bf16.mxu0 0
    %1100 = vmatmul.mubr.bf16.gmra.mxu0 %v973
    %v1101 = vpop.f32.mrf.mxu0
    %v1102 = vadd.f32 %v994, %v1101
    %v1103 = vpop.f32.mrf.mxu0
    %v1104 = vpop.f32.mrf.mxu0
    %v1105 = vadd.f32 %v994, %v1104
    %v1106 = vpop.f32.mrf.mxu0
    %1107 = vmatprep.mubr.bf16.mxu0 0
    %1108 = vmatmul.mubr.bf16.gmra.mxu0 %v974
    %v1109 = vpop.f32.mrf.mxu0
    %v1110 = vadd.f32 %v994, %v1109
    %v1111 = vpop.f32.mrf.mxu0
    %v1112 = vpop.f32.mrf.mxu0
    %v1113 = vadd.f32 %v994, %v1112
    %v1114 = vpop.f32.mrf.mxu0
    %1115 = vmatprep.mubr.bf16.mxu0 0
    %1116 = vmatmul.mubr.bf16.gmra.mxu0 %v975
    %v1117 = vpop.f32.mrf.mxu0
    %v1118 = vadd.f32 %v994, %v1117
    %v1119 = vpop.f32.mrf.mxu0
    %v1120 = vpop.f32.mrf.mxu0
    %v1121 = vadd.f32 %v994, %v1120
    %v1122 = vpop.f32.mrf.mxu0
    %1123 = vmatprep.mubr.bf16.mxu0 0
    %1124 = vmatmul.mubr.bf16.gmra.mxu0 %v976
    %v1125 = vpop.f32.mrf.mxu0
    %v1126 = vadd.f32 %v994, %v1125
    %v1127 = vpop.f32.mrf.mxu0
    %v1128 = vpop.f32.mrf.mxu0
    %v1129 = vadd.f32 %v994, %v1128
    %v1130 = vpop.f32.mrf.mxu0
    %1131 = vmatprep.mubr.bf16.mxu0 0
    %1132 = vmatmul.mubr.bf16.gmra.mxu0 %v977
    %v1133 = vpop.f32.mrf.mxu0
    %v1134 = vadd.f32 %v994, %v1133
    %v1135 = vpop.f32.mrf.mxu0
    %v1136 = vpop.f32.mrf.mxu0
    %v1137 = vadd.f32 %v994, %v1136
    %v1138 = vpop.f32.mrf.mxu0
    %1139 = vdwg.mxu0
    %v1140 = vmax.f32 %v1078, 0.0
    %v1141 = vmax.f32 %v1081, 0.0
    %v1142 = vmax.f32 %v1086, 0.0
    %v1143 = vmax.f32 %v1089, 0.0
    %v1144 = vmax.f32 %v1094, 0.0
    %v1145 = vmax.f32 %v1097, 0.0
    %v1146 = vmax.f32 %v1102, 0.0
    %v1147 = vmax.f32 %v1105, 0.0
    %v1148 = vmax.f32 %v1110, 0.0
    %v1149 = vmax.f32 %v1113, 0.0
    %v1150 = vmax.f32 %v1118, 0.0
    %v1151 = vmax.f32 %v1121, 0.0
    %v1152 = vmax.f32 %v1126, 0.0
    %v1153 = vmax.f32 %v1129, 0.0
    %v1154 = vmax.f32 %v1134, 0.0
    %v1155 = vmax.f32 %v1137, 0.0
    %v1156 = vpack.c.bf16 %v1141, %v1140
    %v1157 = vpack.c.bf16 %v1143, %v1142
    %v1158 = vpack.c.bf16 %v1145, %v1144
    %v1159 = vpack.c.bf16 %v1147, %v1146
    %v1160 = vpack.c.bf16 %v1149, %v1148
    %v1161 = vpack.c.bf16 %v1151, %v1150
    %v1162 = vpack.c.bf16 %v1153, %v1152
    %v1163 = vpack.c.bf16 %v1155, %v1154
    %v1164 = vld [vmem:[#allocation2 + $0x300] sm:$0xf]
    %v1165 = vld [vmem:[#allocation2 + $0x308] sm:$0xf]
    %v1166 = vld [vmem:[#allocation2 + $0x310] sm:$0xf]
    %v1167 = vld [vmem:[#allocation2 + $0x318] sm:$0xf]
    %v1168 = vld [vmem:[#allocation2 + $0x320] sm:$0xf]
    %v1169 = vld [vmem:[#allocation2 + $0x328] sm:$0xf]
    %v1170 = vld [vmem:[#allocation2 + $0x330] sm:$0xf]
    %v1171 = vld [vmem:[#allocation2 + $0x338] sm:$0xf]
    %v1172 = vld [vmem:[#allocation2 + $0x340] sm:$0xf]
    %v1173 = vld [vmem:[#allocation2 + $0x348] sm:$0xf]
    %v1174 = vld [vmem:[#allocation2 + $0x350] sm:$0xf]
    %v1175 = vld [vmem:[#allocation2 + $0x358] sm:$0xf]
    %v1176 = vld [vmem:[#allocation2 + $0x360] sm:$0xf]
    %v1177 = vld [vmem:[#allocation2 + $0x368] sm:$0xf]
    %v1178 = vld [vmem:[#allocation2 + $0x370] sm:$0xf]
    %v1179 = vld [vmem:[#allocation2 + $0x378] sm:$0xf]
    %v1180 = vld [vmem:[%s2 + $0x4] ss:$0 sm:$0xff]
    %v1197 = vunpack.c.l.b16 %v1164
    %v1198 = vunpack.c.l.b16 %v1165
    %v1199 = vunpack.c.l.b16 %v1166
    %v1200 = vunpack.c.l.b16 %v1167
    %v1201 = vunpack.c.l.b16 %v1168
    %v1202 = vunpack.c.l.b16 %v1169
    %v1203 = vunpack.c.l.b16 %v1170
    %v1204 = vunpack.c.l.b16 %v1171
    %v1205 = vunpack.c.l.b16 %v1172
    %v1206 = vunpack.c.l.b16 %v1173
    %v1207 = vunpack.c.l.b16 %v1174
    %v1208 = vunpack.c.l.b16 %v1175
    %v1209 = vunpack.c.l.b16 %v1176
    %v1210 = vunpack.c.l.b16 %v1177
    %v1211 = vunpack.c.l.b16 %v1178
    %v1212 = vunpack.c.l.b16 %v1179
    %v1213 = vpack.c.b16 %v1198, %v1197
    %v1214 = vpack.c.b16 %v1200, %v1199
    %v1215 = vpack.c.b16 %v1202, %v1201
    %v1216 = vpack.c.b16 %v1204, %v1203
    %v1217 = vpack.c.b16 %v1206, %v1205
    %v1218 = vpack.c.b16 %v1208, %v1207
    %v1219 = vpack.c.b16 %v1210, %v1209
    %v1220 = vpack.c.b16 %v1212, %v1211
    %1229 = vmatprep.subr.bf16.mxu0 0
    %1230 = vmatpush1.bf16.msra.mxu0 %v1220
    %1231 = vmatprep.subr.bf16.mxu0 0
    %1232 = vmatpush1.bf16.msra.mxu0 %v1219
    %1233 = vmatprep.subr.bf16.mxu0 0
    %1234 = vmatpush1.bf16.msra.mxu0 %v1218
    %1235 = vmatprep.subr.bf16.mxu0 0
    %1236 = vmatpush1.bf16.msra.mxu0 %v1217
    %1237 = vmatprep.subr.bf16.mxu0 0
    %1238 = vmatpush1.bf16.msra.mxu0 %v1216
    %1239 = vmatprep.subr.bf16.mxu0 0
    %1240 = vmatpush1.bf16.msra.mxu0 %v1215
    %1241 = vmatprep.subr.bf16.mxu0 0
    %1242 = vmatpush1.bf16.msra.mxu0 %v1214
    %1243 = vmatprep.subr.bf16.mxu0 0
    %1244 = vmatpush1.bf16.msra.mxu0 %v1213
    %1245 = vmatprep.subr.bf16.mxu0 0
    %1246 = vmatpush2.bf16.msra.mxu0 0
    %1247 = vmatprep.subr.bf16.mxu0 0
    %1248 = vmatpush2.bf16.msra.mxu0 0
    %1249 = vmatprep.subr.bf16.mxu0 0
    %1250 = vmatpush2.bf16.msra.mxu0 0
    %1251 = vmatprep.subr.bf16.mxu0 0
    %1252 = vmatpush2.bf16.msra.mxu0 0
    %1253 = vmatprep.subr.bf16.mxu0 0
    %1254 = vmatpush2.bf16.msra.mxu0 0
    %1255 = vmatprep.subr.bf16.mxu0 0
    %1256 = vmatpush2.bf16.msra.mxu0 0
    %1257 = vmatprep.subr.bf16.mxu0 0
    %1258 = vmatpush2.bf16.msra.mxu0 0
    %1259 = vmatprep.subr.bf16.mxu0 0
    %1260 = vmatpush2.bf16.msra.mxu0 0
    %1261 = vmatprep.mubr.bf16.mxu0 0
    %1262 = vmatmul.mubr.bf16.gmra.mxu0 %v1156
    %v1263 = vpop.f32.mrf.mxu0
    %v1264 = vadd.f32 %v1180, %v1263
    %v1265 = vpop.f32.mrf.mxu0
    %v1266 = vpop.f32.mrf.mxu0
    %v1267 = vadd.f32 %v1180, %v1266
    %v1268 = vpop.f32.mrf.mxu0
    %1269 = vmatprep.mubr.bf16.mxu0 0
    %1270 = vmatmul.mubr.bf16.gmra.mxu0 %v1157
    %v1271 = vpop.f32.mrf.mxu0
    %v1272 = vadd.f32 %v1180, %v1271
    %v1273 = vpop.f32.mrf.mxu0
    %v1274 = vpop.f32.mrf.mxu0
    %v1275 = vadd.f32 %v1180, %v1274
    %v1276 = vpop.f32.mrf.mxu0
    %1277 = vmatprep.mubr.bf16.mxu0 0
    %1278 = vmatmul.mubr.bf16.gmra.mxu0 %v1158
    %v1279 = vpop.f32.mrf.mxu0
    %v1280 = vadd.f32 %v1180, %v1279
    %v1281 = vpop.f32.mrf.mxu0
    %v1282 = vpop.f32.mrf.mxu0
    %v1283 = vadd.f32 %v1180, %v1282
    %v1284 = vpop.f32.mrf.mxu0
    %1285 = vmatprep.mubr.bf16.mxu0 0
    %1286 = vmatmul.mubr.bf16.gmra.mxu0 %v1159
    %v1287 = vpop.f32.mrf.mxu0
    %v1288 = vadd.f32 %v1180, %v1287
    %v1289 = vpop.f32.mrf.mxu0
    %v1290 = vpop.f32.mrf.mxu0
    %v1291 = vadd.f32 %v1180, %v1290
    %v1292 = vpop.f32.mrf.mxu0
    %1293 = vmatprep.mubr.bf16.mxu0 0
    %1294 = vmatmul.mubr.bf16.gmra.mxu0 %v1160
    %v1295 = vpop.f32.mrf.mxu0
    %v1296 = vadd.f32 %v1180, %v1295
    %v1297 = vpop.f32.mrf.mxu0
    %v1298 = vpop.f32.mrf.mxu0
    %v1299 = vadd.f32 %v1180, %v1298
    %v1300 = vpop.f32.mrf.mxu0
    %1301 = vmatprep.mubr.bf16.mxu0 0
    %1302 = vmatmul.mubr.bf16.gmra.mxu0 %v1161
    %v1303 = vpop.f32.mrf.mxu0
    %v1304 = vadd.f32 %v1180, %v1303
    %v1305 = vpop.f32.mrf.mxu0
    %v1306 = vpop.f32.mrf.mxu0
    %v1307 = vadd.f32 %v1180, %v1306
    %v1308 = vpop.f32.mrf.mxu0
    %1309 = vmatprep.mubr.bf16.mxu0 0
    %1310 = vmatmul.mubr.bf16.gmra.mxu0 %v1162
    %v1311 = vpop.f32.mrf.mxu0
    %v1312 = vadd.f32 %v1180, %v1311
    %v1313 = vpop.f32.mrf.mxu0
    %v1314 = vpop.f32.mrf.mxu0
    %v1315 = vadd.f32 %v1180, %v1314
    %v1316 = vpop.f32.mrf.mxu0
    %1317 = vmatprep.mubr.bf16.mxu0 0
    %1318 = vmatmul.mubr.bf16.gmra.mxu0 %v1163
    %v1319 = vpop.f32.mrf.mxu0
    %v1320 = vadd.f32 %v1180, %v1319
    %v1321 = vpop.f32.mrf.mxu0
    %v1322 = vpop.f32.mrf.mxu0
    %v1323 = vadd.f32 %v1180, %v1322
    %v1324 = vpop.f32.mrf.mxu0
    %1325 = vdwg.mxu0
    %v1326 = vlaneseq
    %v1327 = vand.u32 %v1326, 127
    %vm1328 = vcmp.ge.s32.totalorder %v1327, 0
    %vm1329 = vcmp.lt.s32.totalorder %v1327, 5
    %vm1330 = vmand %vm1328, %vm1329
    %v1331 = vsel %vm1330, %v1264, -inf
    %v1332 = vsel %vm1330, %v1267, -inf
    %v1333 = vsel %vm1330, %v1272, -inf
    %v1334 = vsel %vm1330, %v1275, -inf
    %v1335 = vsel %vm1330, %v1280, -inf
    %v1336 = vsel %vm1330, %v1283, -inf
    %v1337 = vsel %vm1330, %v1288, -inf
    %v1338 = vsel %vm1330, %v1291, -inf
    %v1339 = vsel %vm1330, %v1296, -inf
    %v1340 = vsel %vm1330, %v1299, -inf
    %v1341 = vsel %vm1330, %v1304, -inf
    %v1342 = vsel %vm1330, %v1307, -inf
    %v1343 = vsel %vm1330, %v1312, -inf
    %v1344 = vsel %vm1330, %v1315, -inf
    %v1345 = vsel %vm1330, %v1320, -inf
    %v1346 = vsel %vm1330, %v1323, -inf
    %1347 = vmax.xlane.f32.xlu0 %v1331
    %v1348 = vpop.xlane.xlu0 %1347
    %1349 = vmax.xlane.f32.xlu0 %v1332
    %v1350 = vpop.xlane.xlu0 %1349
    %1351 = vmax.xlane.f32.xlu0 %v1333
    %v1352 = vpop.xlane.xlu0 %1351
    %1353 = vmax.xlane.f32.xlu0 %v1334
    %v1354 = vpop.xlane.xlu0 %1353
    %1355 = vmax.xlane.f32.xlu0 %v1335
    %v1356 = vpop.xlane.xlu0 %1355
    %1357 = vmax.xlane.f32.xlu0 %v1336
    %v1358 = vpop.xlane.xlu0 %1357
    %1359 = vmax.xlane.f32.xlu0 %v1337
    %v1360 = vpop.xlane.xlu0 %1359
    %1361 = vmax.xlane.f32.xlu0 %v1338
    %v1362 = vpop.xlane.xlu0 %1361
    %1363 = vmax.xlane.f32.xlu0 %v1339
    %v1364 = vpop.xlane.xlu0 %1363
    %1365 = vmax.xlane.f32.xlu0 %v1340
    %v1366 = vpop.xlane.xlu0 %1365
    %1367 = vmax.xlane.f32.xlu0 %v1341
    %v1368 = vpop.xlane.xlu0 %1367
    %1369 = vmax.xlane.f32.xlu0 %v1342
    %v1370 = vpop.xlane.xlu0 %1369
    %1371 = vmax.xlane.f32.xlu0 %v1343
    %v1372 = vpop.xlane.xlu0 %1371
    %1373 = vmax.xlane.f32.xlu0 %v1344
    %v1374 = vpop.xlane.xlu0 %1373
    %1375 = vmax.xlane.f32.xlu0 %v1345
    %v1376 = vpop.xlane.xlu0 %1375
    %1377 = vmax.xlane.f32.xlu0 %v1346
    %v1378 = vpop.xlane.xlu0 %1377
    %v1379 = vsub.f32 %v1264, %v1348
    %v1380 = vsub.f32 %v1267, %v1350
    %v1381 = vsub.f32 %v1272, %v1352
    %v1382 = vsub.f32 %v1275, %v1354
    %v1383 = vsub.f32 %v1280, %v1356
    %v1384 = vsub.f32 %v1283, %v1358
    %v1385 = vsub.f32 %v1288, %v1360
    %v1386 = vsub.f32 %v1291, %v1362
    %v1387 = vsub.f32 %v1296, %v1364
    %v1388 = vsub.f32 %v1299, %v1366
    %v1389 = vsub.f32 %v1304, %v1368
    %v1390 = vsub.f32 %v1307, %v1370
    %v1391 = vsub.f32 %v1312, %v1372
    %v1392 = vsub.f32 %v1315, %v1374
    %v1393 = vsub.f32 %v1320, %v1376
    %v1394 = vsub.f32 %v1323, %v1378
    %v1395 = vmul.f32 %v1379, 1.442695
    %v1396 = vpow.pop %v1395
    %v1397 = vmul.f32 %v1380, 1.442695
    %v1398 = vpow.pop %v1397
    %v1399 = vmul.f32 %v1381, 1.442695
    %v1400 = vpow.pop %v1399
    %v1401 = vmul.f32 %v1382, 1.442695
    %v1402 = vpow.pop %v1401
    %v1403 = vmul.f32 %v1383, 1.442695
    %v1404 = vpow.pop %v1403
    %v1405 = vmul.f32 %v1384, 1.442695
    %v1406 = vpow.pop %v1405
    %v1407 = vmul.f32 %v1385, 1.442695
    %v1408 = vpow.pop %v1407
    %v1409 = vmul.f32 %v1386, 1.442695
    %v1410 = vpow.pop %v1409
    %v1411 = vmul.f32 %v1387, 1.442695
    %v1412 = vpow.pop %v1411
    %v1413 = vmul.f32 %v1388, 1.442695
    %v1414 = vpow.pop %v1413
    %v1415 = vmul.f32 %v1389, 1.442695
    %v1416 = vpow.pop %v1415
    %v1417 = vmul.f32 %v1390, 1.442695
    %v1418 = vpow.pop %v1417
    %v1419 = vmul.f32 %v1391, 1.442695
    %v1420 = vpow.pop %v1419
    %v1421 = vmul.f32 %v1392, 1.442695
    %v1422 = vpow.pop %v1421
    %v1423 = vmul.f32 %v1393, 1.442695
    %v1424 = vpow.pop %v1423
    %v1425 = vmul.f32 %v1394, 1.442695
    %v1426 = vpow.pop %v1425
    %v1427 = vsel %vm1330, %v1396, 0.0
    %v1428 = vsel %vm1330, %v1398, 0.0
    %v1429 = vsel %vm1330, %v1400, 0.0
    %v1430 = vsel %vm1330, %v1402, 0.0
    %v1431 = vsel %vm1330, %v1404, 0.0
    %v1432 = vsel %vm1330, %v1406, 0.0
    %v1433 = vsel %vm1330, %v1408, 0.0
    %v1434 = vsel %vm1330, %v1410, 0.0
    %v1435 = vsel %vm1330, %v1412, 0.0
    %v1436 = vsel %vm1330, %v1414, 0.0
    %v1437 = vsel %vm1330, %v1416, 0.0
    %v1438 = vsel %vm1330, %v1418, 0.0
    %v1439 = vsel %vm1330, %v1420, 0.0
    %v1440 = vsel %vm1330, %v1422, 0.0
    %v1441 = vsel %vm1330, %v1424, 0.0
    %v1442 = vsel %vm1330, %v1426, 0.0
    %1443 = vadd.xlane.f32.xlu0 %v1427
    %v1444 = vpop.xlane.xlu0 %1443
    %1445 = vadd.xlane.f32.xlu0 %v1428
    %v1446 = vpop.xlane.xlu0 %1445
    %1447 = vadd.xlane.f32.xlu0 %v1429
    %v1448 = vpop.xlane.xlu0 %1447
    %1449 = vadd.xlane.f32.xlu0 %v1430
    %v1450 = vpop.xlane.xlu0 %1449
    %1451 = vadd.xlane.f32.xlu0 %v1431
    %v1452 = vpop.xlane.xlu0 %1451
    %1453 = vadd.xlane.f32.xlu0 %v1432
    %v1454 = vpop.xlane.xlu0 %1453
    %1455 = vadd.xlane.f32.xlu0 %v1433
    %v1456 = vpop.xlane.xlu0 %1455
    %1457 = vadd.xlane.f32.xlu0 %v1434
    %v1458 = vpop.xlane.xlu0 %1457
    %1459 = vadd.xlane.f32.xlu0 %v1435
    %v1460 = vpop.xlane.xlu0 %1459
    %1461 = vadd.xlane.f32.xlu0 %v1436
    %v1462 = vpop.xlane.xlu0 %1461
    %1463 = vadd.xlane.f32.xlu0 %v1437
    %v1464 = vpop.xlane.xlu0 %1463
    %1465 = vadd.xlane.f32.xlu0 %v1438
    %v1466 = vpop.xlane.xlu0 %1465
    %1467 = vadd.xlane.f32.xlu0 %v1439
    %v1468 = vpop.xlane.xlu0 %1467
    %1469 = vadd.xlane.f32.xlu0 %v1440
    %v1470 = vpop.xlane.xlu0 %1469
    %1471 = vadd.xlane.f32.xlu0 %v1441
    %v1472 = vpop.xlane.xlu0 %1471
    %1473 = vadd.xlane.f32.xlu0 %v1442
    %v1474 = vpop.xlane.xlu0 %1473
    %v1475 = vlog2.pop %v1444
    %v1476 = vmul.f32 %v1475, 0.6931472
    %v1477 = vlog2.pop %v1446
    %v1478 = vmul.f32 %v1477, 0.6931472
    %v1479 = vlog2.pop %v1448
    %v1480 = vmul.f32 %v1479, 0.6931472
    %v1481 = vlog2.pop %v1450
    %v1482 = vmul.f32 %v1481, 0.6931472
    %v1483 = vlog2.pop %v1452
    %v1484 = vmul.f32 %v1483, 0.6931472
    %v1485 = vlog2.pop %v1454
    %v1486 = vmul.f32 %v1485, 0.6931472
    %v1487 = vlog2.pop %v1456
    %v1488 = vmul.f32 %v1487, 0.6931472
    %v1489 = vlog2.pop %v1458
    %v1490 = vmul.f32 %v1489, 0.6931472
    %v1491 = vlog2.pop %v1460
    %v1492 = vmul.f32 %v1491, 0.6931472
    %v1493 = vlog2.pop %v1462
    %v1494 = vmul.f32 %v1493, 0.6931472
    %v1495 = vlog2.pop %v1464
    %v1496 = vmul.f32 %v1495, 0.6931472
    %v1497 = vlog2.pop %v1466
    %v1498 = vmul.f32 %v1497, 0.6931472
    %v1499 = vlog2.pop %v1468
    %v1500 = vmul.f32 %v1499, 0.6931472
    %v1501 = vlog2.pop %v1470
    %v1502 = vmul.f32 %v1501, 0.6931472
    %v1503 = vlog2.pop %v1472
    %v1504 = vmul.f32 %v1503, 0.6931472
    %v1505 = vlog2.pop %v1474
    %v1506 = vmul.f32 %v1505, 0.6931472
    %v1507 = vsub.f32 %v1379, %v1476
    %v1508 = vsub.f32 %v1380, %v1478
    %v1509 = vsub.f32 %v1381, %v1480
    %v1510 = vsub.f32 %v1382, %v1482
    %v1511 = vsub.f32 %v1383, %v1484
    %v1512 = vsub.f32 %v1384, %v1486
    %v1513 = vsub.f32 %v1385, %v1488
    %v1514 = vsub.f32 %v1386, %v1490
    %v1515 = vsub.f32 %v1387, %v1492
    %v1516 = vsub.f32 %v1388, %v1494
    %v1517 = vsub.f32 %v1389, %v1496
    %v1518 = vsub.f32 %v1390, %v1498
    %v1519 = vsub.f32 %v1391, %v1500
    %v1520 = vsub.f32 %v1392, %v1502
    %v1521 = vsub.f32 %v1393, %v1504
    %v1522 = vsub.f32 %v1394, %v1506
    %v1523 = vsel %vm1330, %v1507, 0.0
    %v1524 = vsel %vm1330, %v1508, 0.0
    %v1525 = vsel %vm1330, %v1509, 0.0
    %v1526 = vsel %vm1330, %v1510, 0.0
    %v1527 = vsel %vm1330, %v1511, 0.0
    %v1528 = vsel %vm1330, %v1512, 0.0
    %v1529 = vsel %vm1330, %v1513, 0.0
    %v1530 = vsel %vm1330, %v1514, 0.0
    %v1531 = vsel %vm1330, %v1515, 0.0
    %v1532 = vsel %vm1330, %v1516, 0.0
    %v1533 = vsel %vm1330, %v1517, 0.0
    %v1534 = vsel %vm1330, %v1518, 0.0
    %v1535 = vsel %vm1330, %v1519, 0.0
    %v1536 = vsel %vm1330, %v1520, 0.0
    %v1537 = vsel %vm1330, %v1521, 0.0
    %v1538 = vsel %vm1330, %v1522, 0.0
    %vm1539 = vcmp.ge.s32.totalorder %v1327, 5
    %vm1540 = vcmp.lt.s32.totalorder %v1327, 12
    %vm1541 = vmand %vm1539, %vm1540
    %v1542 = vsel %vm1541, %v1264, -inf
    %v1543 = vsel %vm1541, %v1267, -inf
    %v1544 = vsel %vm1541, %v1272, -inf
    %v1545 = vsel %vm1541, %v1275, -inf
    %v1546 = vsel %vm1541, %v1280, -inf
    %v1547 = vsel %vm1541, %v1283, -inf
    %v1548 = vsel %vm1541, %v1288, -inf
    %v1549 = vsel %vm1541, %v1291, -inf
    %v1550 = vsel %vm1541, %v1296, -inf
    %v1551 = vsel %vm1541, %v1299, -inf
    %v1552 = vsel %vm1541, %v1304, -inf
    %v1553 = vsel %vm1541, %v1307, -inf
    %v1554 = vsel %vm1541, %v1312, -inf
    %v1555 = vsel %vm1541, %v1315, -inf
    %v1556 = vsel %vm1541, %v1320, -inf
    %v1557 = vsel %vm1541, %v1323, -inf
    %1558 = vmax.xlane.f32.xlu0 %v1542
    %v1559 = vpop.xlane.xlu0 %1558
    %1560 = vmax.xlane.f32.xlu0 %v1543
    %v1561 = vpop.xlane.xlu0 %1560
    %1562 = vmax.xlane.f32.xlu0 %v1544
    %v1563 = vpop.xlane.xlu0 %1562
    %1564 = vmax.xlane.f32.xlu0 %v1545
    %v1565 = vpop.xlane.xlu0 %1564
    %1566 = vmax.xlane.f32.xlu0 %v1546
    %v1567 = vpop.xlane.xlu0 %1566
    %1568 = vmax.xlane.f32.xlu0 %v1547
    %v1569 = vpop.xlane.xlu0 %1568
    %1570 = vmax.xlane.f32.xlu0 %v1548
    %v1571 = vpop.xlane.xlu0 %1570
    %1572 = vmax.xlane.f32.xlu0 %v1549
    %v1573 = vpop.xlane.xlu0 %1572
    %1574 = vmax.xlane.f32.xlu0 %v1550
    %v1575 = vpop.xlane.xlu0 %1574
    %1576 = vmax.xlane.f32.xlu0 %v1551
    %v1577 = vpop.xlane.xlu0 %1576
    %1578 = vmax.xlane.f32.xlu0 %v1552
    %v1579 = vpop.xlane.xlu0 %1578
    %1580 = vmax.xlane.f32.xlu0 %v1553
    %v1581 = vpop.xlane.xlu0 %1580
    %1582 = vmax.xlane.f32.xlu0 %v1554
    %v1583 = vpop.xlane.xlu0 %1582
    %1584 = vmax.xlane.f32.xlu0 %v1555
    %v1585 = vpop.xlane.xlu0 %1584
    %1586 = vmax.xlane.f32.xlu0 %v1556
    %v1587 = vpop.xlane.xlu0 %1586
    %1588 = vmax.xlane.f32.xlu0 %v1557
    %v1589 = vpop.xlane.xlu0 %1588
    %v1590 = vsub.f32 %v1264, %v1559
    %v1591 = vsub.f32 %v1267, %v1561
    %v1592 = vsub.f32 %v1272, %v1563
    %v1593 = vsub.f32 %v1275, %v1565
    %v1594 = vsub.f32 %v1280, %v1567
    %v1595 = vsub.f32 %v1283, %v1569
    %v1596 = vsub.f32 %v1288, %v1571
    %v1597 = vsub.f32 %v1291, %v1573
    %v1598 = vsub.f32 %v1296, %v1575
    %v1599 = vsub.f32 %v1299, %v1577
    %v1600 = vsub.f32 %v1304, %v1579
    %v1601 = vsub.f32 %v1307, %v1581
    %v1602 = vsub.f32 %v1312, %v1583
    %v1603 = vsub.f32 %v1315, %v1585
    %v1604 = vsub.f32 %v1320, %v1587
    %v1605 = vsub.f32 %v1323, %v1589
    %v1606 = vmul.f32 %v1590, 1.442695
    %v1607 = vpow.pop %v1606
    %v1608 = vmul.f32 %v1591, 1.442695
    %v1609 = vpow.pop %v1608
    %v1610 = vmul.f32 %v1592, 1.442695
    %v1611 = vpow.pop %v1610
    %v1612 = vmul.f32 %v1593, 1.442695
    %v1613 = vpow.pop %v1612
    %v1614 = vmul.f32 %v1594, 1.442695
    %v1615 = vpow.pop %v1614
    %v1616 = vmul.f32 %v1595, 1.442695
    %v1617 = vpow.pop %v1616
    %v1618 = vmul.f32 %v1596, 1.442695
    %v1619 = vpow.pop %v1618
    %v1620 = vmul.f32 %v1597, 1.442695
    %v1621 = vpow.pop %v1620
    %v1622 = vmul.f32 %v1598, 1.442695
    %v1623 = vpow.pop %v1622
    %v1624 = vmul.f32 %v1599, 1.442695
    %v1625 = vpow.pop %v1624
    %v1626 = vmul.f32 %v1600, 1.442695
    %v1627 = vpow.pop %v1626
    %v1628 = vmul.f32 %v1601, 1.442695
    %v1629 = vpow.pop %v1628
    %v1630 = vmul.f32 %v1602, 1.442695
    %v1631 = vpow.pop %v1630
    %v1632 = vmul.f32 %v1603, 1.442695
    %v1633 = vpow.pop %v1632
    %v1634 = vmul.f32 %v1604, 1.442695
    %v1635 = vpow.pop %v1634
    %v1636 = vmul.f32 %v1605, 1.442695
    %v1637 = vpow.pop %v1636
    %v1638 = vsel %vm1541, %v1607, 0.0
    %v1639 = vsel %vm1541, %v1609, 0.0
    %v1640 = vsel %vm1541, %v1611, 0.0
    %v1641 = vsel %vm1541, %v1613, 0.0
    %v1642 = vsel %vm1541, %v1615, 0.0
    %v1643 = vsel %vm1541, %v1617, 0.0
    %v1644 = vsel %vm1541, %v1619, 0.0
    %v1645 = vsel %vm1541, %v1621, 0.0
    %v1646 = vsel %vm1541, %v1623, 0.0
    %v1647 = vsel %vm1541, %v1625, 0.0
    %v1648 = vsel %vm1541, %v1627, 0.0
    %v1649 = vsel %vm1541, %v1629, 0.0
    %v1650 = vsel %vm1541, %v1631, 0.0
    %v1651 = vsel %vm1541, %v1633, 0.0
    %v1652 = vsel %vm1541, %v1635, 0.0
    %v1653 = vsel %vm1541, %v1637, 0.0
    %1654 = vadd.xlane.f32.xlu0 %v1638
    %v1655 = vpop.xlane.xlu0 %1654
    %1656 = vadd.xlane.f32.xlu0 %v1639
    %v1657 = vpop.xlane.xlu0 %1656
    %1658 = vadd.xlane.f32.xlu0 %v1640
    %v1659 = vpop.xlane.xlu0 %1658
    %1660 = vadd.xlane.f32.xlu0 %v1641
    %v1661 = vpop.xlane.xlu0 %1660
    %1662 = vadd.xlane.f32.xlu0 %v1642
    %v1663 = vpop.xlane.xlu0 %1662
    %1664 = vadd.xlane.f32.xlu0 %v1643
    %v1665 = vpop.xlane.xlu0 %1664
    %1666 = vadd.xlane.f32.xlu0 %v1644
    %v1667 = vpop.xlane.xlu0 %1666
    %1668 = vadd.xlane.f32.xlu0 %v1645
    %v1669 = vpop.xlane.xlu0 %1668
    %1670 = vadd.xlane.f32.xlu0 %v1646
    %v1671 = vpop.xlane.xlu0 %1670
    %1672 = vadd.xlane.f32.xlu0 %v1647
    %v1673 = vpop.xlane.xlu0 %1672
    %1674 = vadd.xlane.f32.xlu0 %v1648
    %v1675 = vpop.xlane.xlu0 %1674
    %1676 = vadd.xlane.f32.xlu0 %v1649
    %v1677 = vpop.xlane.xlu0 %1676
    %1678 = vadd.xlane.f32.xlu0 %v1650
    %v1679 = vpop.xlane.xlu0 %1678
    %1680 = vadd.xlane.f32.xlu0 %v1651
    %v1681 = vpop.xlane.xlu0 %1680
    %1682 = vadd.xlane.f32.xlu0 %v1652
    %v1683 = vpop.xlane.xlu0 %1682
    %1684 = vadd.xlane.f32.xlu0 %v1653
    %v1685 = vpop.xlane.xlu0 %1684
    %v1686 = vlog2.pop %v1655
    %v1687 = vmul.f32 %v1686, 0.6931472
    %v1688 = vlog2.pop %v1657
    %v1689 = vmul.f32 %v1688, 0.6931472
    %v1690 = vlog2.pop %v1659
    %v1691 = vmul.f32 %v1690, 0.6931472
    %v1692 = vlog2.pop %v1661
    %v1693 = vmul.f32 %v1692, 0.6931472
    %v1694 = vlog2.pop %v1663
    %v1695 = vmul.f32 %v1694, 0.6931472
    %v1696 = vlog2.pop %v1665
    %v1697 = vmul.f32 %v1696, 0.6931472
    %v1698 = vlog2.pop %v1667
    %v1699 = vmul.f32 %v1698, 0.6931472
    %v1700 = vlog2.pop %v1669
    %v1701 = vmul.f32 %v1700, 0.6931472
    %v1702 = vlog2.pop %v1671
    %v1703 = vmul.f32 %v1702, 0.6931472
    %v1704 = vlog2.pop %v1673
    %v1705 = vmul.f32 %v1704, 0.6931472
    %v1706 = vlog2.pop %v1675
    %v1707 = vmul.f32 %v1706, 0.6931472
    %v1708 = vlog2.pop %v1677
    %v1709 = vmul.f32 %v1708, 0.6931472
    %v1710 = vlog2.pop %v1679
    %v1711 = vmul.f32 %v1710, 0.6931472
    %v1712 = vlog2.pop %v1681
    %v1713 = vmul.f32 %v1712, 0.6931472
    %v1714 = vlog2.pop %v1683
    %v1715 = vmul.f32 %v1714, 0.6931472
    %v1716 = vlog2.pop %v1685
    %v1717 = vmul.f32 %v1716, 0.6931472
    %v1718 = vsub.f32 %v1590, %v1687
    %v1719 = vsub.f32 %v1591, %v1689
    %v1720 = vsub.f32 %v1592, %v1691
    %v1721 = vsub.f32 %v1593, %v1693
    %v1722 = vsub.f32 %v1594, %v1695
    %v1723 = vsub.f32 %v1595, %v1697
    %v1724 = vsub.f32 %v1596, %v1699
    %v1725 = vsub.f32 %v1597, %v1701
    %v1726 = vsub.f32 %v1598, %v1703
    %v1727 = vsub.f32 %v1599, %v1705
    %v1728 = vsub.f32 %v1600, %v1707
    %v1729 = vsub.f32 %v1601, %v1709
    %v1730 = vsub.f32 %v1602, %v1711
    %v1731 = vsub.f32 %v1603, %v1713
    %v1732 = vsub.f32 %v1604, %v1715
    %v1733 = vsub.f32 %v1605, %v1717
    %v1734 = vsel %vm1541, %v1718, %v1523
    %v1735 = vsel %vm1541, %v1719, %v1524
    %v1736 = vsel %vm1541, %v1720, %v1525
    %v1737 = vsel %vm1541, %v1721, %v1526
    %v1738 = vsel %vm1541, %v1722, %v1527
    %v1739 = vsel %vm1541, %v1723, %v1528
    %v1740 = vsel %vm1541, %v1724, %v1529
    %v1741 = vsel %vm1541, %v1725, %v1530
    %v1742 = vsel %vm1541, %v1726, %v1531
    %v1743 = vsel %vm1541, %v1727, %v1532
    %v1744 = vsel %vm1541, %v1728, %v1533
    %v1745 = vsel %vm1541, %v1729, %v1534
    %v1746 = vsel %vm1541, %v1730, %v1535
    %v1747 = vsel %vm1541, %v1731, %v1536
    %v1748 = vsel %vm1541, %v1732, %v1537
    %v1749 = vsel %vm1541, %v1733, %v1538
    %1750 = vst [vmem:[%s3] sm:$0xff] %v1734
    %1751 = vst [vmem:[%s3 + $0x8] sm:$0xff] %v1735
    %1752 = vst [vmem:[%s3 + $0x10] sm:$0xff] %v1736
    %1753 = vst [vmem:[%s3 + $0x18] sm:$0xff] %v1737
    %1754 = vst [vmem:[%s3 + $0x20] sm:$0xff] %v1738
    %1755 = vst [vmem:[%s3 + $0x28] sm:$0xff] %v1739
    %1756 = vst [vmem:[%s3 + $0x30] sm:$0xff] %v1740
    %1757 = vst [vmem:[%s3 + $0x38] sm:$0xff] %v1741
    %1758 = vst [vmem:[%s3 + $0x40] sm:$0xff] %v1742
    %1759 = vst [vmem:[%s3 + $0x48] sm:$0xff] %v1743
    %1760 = vst [vmem:[%s3 + $0x50] sm:$0xff] %v1744
    %1761 = vst [vmem:[%s3 + $0x58] sm:$0xff] %v1745
    %1762 = vst [vmem:[%s3 + $0x60] sm:$0xff] %v1746
    %1763 = vst [vmem:[%s3 + $0x68] sm:$0xff] %v1747
    %1764 = vst [vmem:[%s3 + $0x70] sm:$0xff] %v1748
    %1765 = vst [vmem:[%s3 + $0x78] sm:$0xff] %v1749
    // Predicated region
    $region18: #{_lambda_.1} parent=1 // pred_check
      _
    $region19: #{_lambda_.1} parent=1 // pred_check_branch
      %1767 = sbr.rel (0) target = $region21
    $region20: #{_lambda_.1} parent=1 // pred_region
      _
    $region21: #{_lambda_.1} parent=1 // pred_fallthru
      _
    // Predicated region
    $region22: #{_lambda_.1} parent=1 // pred_check
      _
    $region23: #{_lambda_.1} parent=1 // pred_check_branch
      %1769 = sbr.rel (0) target = $region25
    $region24: #{_lambda_.1} parent=1 // pred_region
      _
    $region25: #{_lambda_.1} parent=1 // pred_fallthru
      _
    %1770 = vsyncpa [#allocation3], 1

</llo_original>
